<compile_context>
chip_gen: v6e
topology: v6e:2x2x1
jax: 0.10.0
libtpu: 0.0.40
codegen_flags: <defaults>
</compile_context>

<pallas_src>
import numpy as np
import jax
import jax.numpy as jnp
from jax.experimental import pallas as pl
from jax.experimental.pallas import tpu as pltpu

# ---------------- config (small shapes consistent with the module) ----------
N_BATCH   = 2
C_IN      = 3
C         = 4                     # starting model channels
N_CLASSES = 10
N_LAYERS  = 6
N_BIG     = N_LAYERS // 3         # n_big_nodes = 2
WINDOW    = 3                     # slide_window
N_OPS     = 8                     # len(gt.PRIMITIVES2) stand-in
STEM_MULT = 4
INPUT_HW  = 16
BN_EPS    = 1e-5
K_PAD     = 32                    # im2col K = 9*C_IN = 27, padded to 32
NEG_BIG   = -1e30                 # padding for missing beta slots (softmax -> 0)


# ---------------- module-level constants (hoisted out of forward) -----------
def _op_fold_matrix_np():
    """(N_OPS, 4) fold matrix for the stand-in candidate ops
    [x, 0, relu(x), -x, 0.5x, 2x, tanh(x), x*x] -> (c_lin, c_relu, c_tanh, c_sq)."""
    s = np.zeros((N_OPS, 4), np.float32)
    s[0, 0] = 1.0   # x
    s[3, 0] = -1.0  # -x
    s[4, 0] = 0.5   # 0.5x
    s[5, 0] = 2.0   # 2x
    s[2, 1] = 1.0   # relu
    s[6, 2] = 1.0   # tanh
    s[7, 3] = 1.0   # square
    return s


def _avgpool2x2_T_np(n, h, w):
    """(n*h*w, n*(h/2)*(w/2)) transposed 2x2 average-pool matrix (right-multiply)."""
    ho, wo = h // 2, w // 2
    ii = np.arange(n * h * w)
    ni, rem = ii // (h * w), ii % (h * w)
    hi, wi = rem // w, rem % w
    oo = ni * (ho * wo) + (hi // 2) * wo + (wi // 2)
    m = np.zeros((n * h * w, n * ho * wo), np.float32)
    m[ii, oo] = 0.25
    return m


def _gap_T_np(n, h, w):
    """(n*h*w, n) transposed global-average-pool matrix (right-multiply)."""
    ii = np.arange(n * h * w)
    m = np.zeros((n * h * w, n), np.float32)
    m[ii, ii // (h * w)] = 1.0 / (h * w)
    return m


_OP_FOLD = _op_fold_matrix_np()                                        # (8, 4)
_P1T = _avgpool2x2_T_np(N_BATCH, INPUT_HW, INPUT_HW)                   # (512, 128)
_P2T = _avgpool2x2_T_np(N_BATCH, INPUT_HW // 2, INPUT_HW // 2)         # (128, 32)
_GT  = _gap_T_np(N_BATCH, INPUT_HW // 4, INPUT_HW // 4)                # (32, 2)


# ======================= the single fused network kernel ====================
def _network_kernel(coef_ref,                                  # SMEM (72,) f32
                    xcolsT_ref, wstemT_ref, shiftT_ref,
                    p1T_ref, wred1a_ref, wred1b_ref,
                    p2T_ref, wred2a_ref, wred2b_ref,
                    gT_ref, wlina_ref, wlinb_ref, blinT_ref,
                    out_ref):
    f32 = jnp.float32

    def edge_coef(d, i, j):
        # beta is already pre-multiplied into the coefficients (wrapper side).
        base = ((d * N_BIG + i) * WINDOW + j) * 4
        return (coef_ref[base + 0], coef_ref[base + 1],
                coef_ref[base + 2], coef_ref[base + 3])

    def edge(x, cf):
        cl, cr, ct, cs = cf
        # Horner: cl*x + cs*x*x == x*(cl + cs*x); relu on VPU, tanh on EUP.
        return x * (cl + cs * x) + cr * jnp.maximum(x, 0.0) + ct * jnp.tanh(x)

    def big_dag(s, d):
        # SearchBigDAGPartiallyConnection stand-in: sliding-window weighted DAG,
        # output = the last two intermediate nodes (channel concat handled by
        # split weights downstream).  Duplicate-input edges (s0 is s1 is s) are
        # merged at trace time: edge(s,c0)+edge(s,c1) == edge(s,c0+c1); the
        # coefficient folding is a handful of scalar adds on the scalar unit.
        states = [s, s]
        for i in range(N_BIG):
            j_edges = min(i + 2, WINDOW)
            window_states = states[-j_edges:]
            merged = []                      # [(source tensor, folded coeffs)]
            for j in range(j_edges):
                cf = edge_coef(d, i, j)
                src = window_states[j]
                for m, (t, acc) in enumerate(merged):
                    if t is src:
                        merged[m] = (t, tuple(a + b for a, b in zip(acc, cf)))
                        break
                else:
                    merged.append((src, cf))
            node = None
            for t, cf in merged:
                e = edge(t, cf)
                node = e if node is None else node + e
            states.append(node)
        return states[-2], states[-1]

    # ---- stem: Conv2d(3x3, pad 1, no bias) as channel-major im2col GEMM
    #      with the BatchNorm scale/shift folded in (eval mode).
    s = jnp.dot(wstemT_ref[...], xcolsT_ref[...],
                preferred_element_type=f32) + shiftT_ref[...]         # (16, 512)

    # ---- DAG1 on (16 channels, 512 = N*16*16) ----
    n0, n1 = big_dag(s, 0)
    # reduction-cell-1 stand-in: 2x2 avg-pool (right-multiply) + 1x1 conv.
    p1 = p1T_ref[...].astype(f32)                                     # (512, 128)
    h0 = jnp.dot(n0, p1, preferred_element_type=f32)                  # (16, 128)
    h1 = jnp.dot(n1, p1, preferred_element_type=f32)
    s = (jnp.dot(wred1a_ref[...], h0, preferred_element_type=f32)
         + jnp.dot(wred1b_ref[...], h1, preferred_element_type=f32))  # (32, 128)

    # ---- DAG2 on (32, 128) ----
    n0, n1 = big_dag(s, 1)
    p2 = p2T_ref[...].astype(f32)                                     # (128, 32)
    h0 = jnp.dot(n0, p2, preferred_element_type=f32)                  # (32, 32)
    h1 = jnp.dot(n1, p2, preferred_element_type=f32)
    s = (jnp.dot(wred2a_ref[...], h0, preferred_element_type=f32)
         + jnp.dot(wred2b_ref[...], h1, preferred_element_type=f32))  # (64, 32)

    # ---- DAG3 on (64, 32) ----
    n0, n1 = big_dag(s, 2)

    # ---- GAP (right-multiply) + Linear head, fused; logits come out (10, N) ----
    g = gT_ref[...].astype(f32)                                       # (32, 2)
    g0 = jnp.dot(n0, g, preferred_element_type=f32)                   # (64, 2)
    g1 = jnp.dot(n1, g, preferred_element_type=f32)
    out_ref[...] = (jnp.dot(wlina_ref[...], g0, preferred_element_type=f32)
                    + jnp.dot(wlinb_ref[...], g1, preferred_element_type=f32)
                    + blinT_ref[...])                                 # (10, 2)


# ------------------------------- wrapper glue --------------------------------
def _stack_alpha_beta(params):
    """Pad+stack alphas into (3*N_BIG, WINDOW, N_OPS) (unused rows zero-padded,
    never read) and betas into (3*N_BIG, WINDOW) (missing slots = -1e30 so their
    softmax weight underflows to 0)."""
    a_rows = []
    for a in params["alpha_DAG"]:
        a = a.astype(jnp.float32)
        a_rows.append(jnp.pad(a, ((0, WINDOW - a.shape[0]), (0, 0))))
    a_stack = jnp.stack(a_rows, axis=0)                        # (6, 3, 8)
    b_rows = []
    for b in params["beta_DAG"]:
        b = b.astype(jnp.float32)
        b_rows.append(jnp.pad(b, (0, WINDOW - b.shape[0]), constant_values=NEG_BIG))
    b_stack = jnp.stack(b_rows, axis=0)                        # (6, 3)
    return a_stack, b_stack


def _im2col_3x3_T(x_nhwc, k_pad):
    """Channel-major im2col: (9*C_in padded to k_pad, N*H*W)."""
    n, h, w, ci = x_nhwc.shape
    xp = jnp.pad(x_nhwc, ((0, 0), (1, 1), (1, 1), (0, 0)))
    cols = [xp[:, kh:kh + h, kw:kw + w, :] for kh in range(3) for kw in range(3)]
    patches = jnp.stack(cols, axis=0)                          # (9, N, H, W, Ci)
    patches = jnp.transpose(patches, (0, 4, 1, 2, 3))          # (9, Ci, N, H, W)
    patches = patches.reshape(9 * ci, n * h * w)               # (27, N*H*W)
    return jnp.pad(patches, ((0, k_pad - 9 * ci), (0, 0)))     # (32, N*H*W)


def forward(x_nchw, params):
    x = jnp.transpose(x_nchw, (0, 2, 3, 1)).astype(jnp.float32)   # NCHW -> NHWC
    n, h, w, _ = x.shape
    c_stem = STEM_MULT * C
    vmem = pltpu.MemorySpace.VMEM
    smem = pltpu.MemorySpace.SMEM

    # ---- controller math in plain jnp (tiny; XLA fuses it ahead of the kernel)
    a_stack, b_stack = _stack_alpha_beta(params)
    asm = jax.nn.softmax(a_stack, axis=-1)                        # (6, 3, 8)
    acoef = jnp.dot(asm, jnp.asarray(_OP_FOLD))                   # (6, 3, 4)
    bsm = jax.nn.softmax(b_stack, axis=-1)                        # (6, 3)
    # Reference forward reuses weight_beta_DAG[0:n_big] for all three DAGs.
    bsm_used = bsm[:N_BIG]                                        # (2, 3)
    coef = (acoef.reshape(3, N_BIG, WINDOW, 4)
            * bsm_used[None, :, :, None]).reshape(-1)             # (72,) -> SMEM

    # ---- stem operands (channel-major) --------------------------------------
    x_colsT = _im2col_3x3_T(x, K_PAD)                             # (32, 512)
    wt = params["stem_w"]                                         # (Cout,Cin,3,3)
    w_stemT = jnp.transpose(wt, (0, 2, 3, 1)).reshape(c_stem, 9 * C_IN)
    w_stemT = jnp.pad(w_stemT, ((0, 0), (0, K_PAD - 9 * C_IN)))   # (16, 32)
    scale = params["stem_gamma"] / jnp.sqrt(params["stem_var"] + BN_EPS)
    w_stemT = w_stemT * scale[:, None]                            # BN scale folded
    shiftT = (params["stem_beta"] - params["stem_mean"] * scale).reshape(c_stem, 1)

    # ---- pool / GAP matrices in bf16 (0.25, 1/16 are exact); upcast in-kernel
    p1T = jnp.asarray(_P1T, dtype=jnp.bfloat16)                   # (512, 128)
    p2T = jnp.asarray(_P2T, dtype=jnp.bfloat16)                   # (128, 32)
    gT  = jnp.asarray(_GT,  dtype=jnp.bfloat16)                   # (32, 2)

    # split + transpose weights so concat([n0, n1]) maps to two MXU calls
    wred1a = params["red1_w"][:c_stem, :].T                       # (32, 16)
    wred1b = params["red1_w"][c_stem:, :].T                       # (32, 16)
    wred2a = params["red2_w"][:2 * c_stem, :].T                   # (64, 32)
    wred2b = params["red2_w"][2 * c_stem:, :].T                   # (64, 32)
    wlina  = params["lin_w"][:16 * C, :].T                        # (10, 64)
    wlinb  = params["lin_w"][16 * C:, :].T                        # (10, 64)
    blinT  = params["lin_b"].reshape(N_CLASSES, 1)                # (10, 1)

    # ---- single fused network kernel (one pallas_call per forward) ----------
    logitsT = pl.pallas_call(
        _network_kernel,
        out_shape=jax.ShapeDtypeStruct((N_CLASSES, n), jnp.float32),
        in_specs=[pl.BlockSpec(memory_space=smem)]                # folded coeffs
                 + [pl.BlockSpec(memory_space=vmem)] * 13,
        out_specs=pl.BlockSpec(memory_space=vmem),
    )(coef,
      x_colsT, w_stemT, shiftT,
      p1T, wred1a, wred1b,
      p2T, wred2a, wred2b,
      gT, wlina, wlinb, blinT)

    return logitsT.T                                              # (N, 10)


# ------------------------------- params --------------------------------------
def init_params(key):
    ks = jax.random.split(key, 12)
    params = {}
    alphas, betas = [], []
    idx = 0
    for _ in range(3):
        for i in range(N_BIG):
            rows = i + 2 if (i + 2) < WINDOW else WINDOW
            alphas.append(0.001 * jax.random.normal(
                jax.random.fold_in(ks[0], idx), (rows, N_OPS), jnp.float32))
            betas.append(0.001 * jax.random.normal(
                jax.random.fold_in(ks[1], idx), (rows,), jnp.float32))
            idx += 1
    params["alpha_DAG"] = alphas
    params["beta_DAG"] = betas

    c_stem = STEM_MULT * C                                    # 16
    params["stem_w"]     = 0.1 * jax.random.normal(ks[2], (c_stem, C_IN, 3, 3), jnp.float32)
    params["stem_gamma"] = 1.0 + 0.01 * jax.random.normal(ks[3], (c_stem,), jnp.float32)
    params["stem_beta"]  = 0.01 * jax.random.normal(ks[4], (c_stem,), jnp.float32)
    params["stem_mean"]  = 0.01 * jax.random.normal(ks[5], (c_stem,), jnp.float32)
    params["stem_var"]   = 1.0 + 0.1 * jnp.abs(jax.random.normal(ks[6], (c_stem,), jnp.float32))
    params["red1_w"] = 0.1 * jax.random.normal(ks[7], (2 * c_stem, 2 * c_stem), jnp.float32)  # 32->32
    params["red2_w"] = 0.1 * jax.random.normal(ks[8], (4 * c_stem, 4 * c_stem), jnp.float32)  # 64->64
    params["lin_w"]  = 0.1 * jax.random.normal(ks[9], (32 * C, N_CLASSES), jnp.float32)       # (128,10)
    params["lin_b"]  = 0.01 * jax.random.normal(ks[10], (N_CLASSES,), jnp.float32)
    return params


if __name__ == "__main__":
    key = jax.random.PRNGKey(0)
    params = init_params(key)
    x = jax.random.normal(jax.random.fold_in(key, 99),
                          (N_BATCH, C_IN, INPUT_HW, INPUT_HW), jnp.float32)  # NCHW like PyTorch
    fwd = jax.jit(forward)
    logits = fwd(x, params)
    jax.block_until_ready(logits)
    assert logits.shape == (N_BATCH, N_CLASSES)
    assert bool(jnp.all(jnp.isfinite(logits)))
    print("KERNEL_OK")
</pallas_src>

<mosaic_0001>
module attributes {stable_mosaic.version = 11 : i64} {
  func.func @_network_kernel(%arg0: memref<72xf32, #tpu.memory_space<smem>>, %arg1: memref<32x512xf32, #tpu.memory_space<vmem>>, %arg2: memref<16x32xf32, #tpu.memory_space<vmem>>, %arg3: memref<16x1xf32, #tpu.memory_space<vmem>>, %arg4: memref<512x128xbf16, #tpu.memory_space<vmem>>, %arg5: memref<32x16xf32, #tpu.memory_space<vmem>>, %arg6: memref<32x16xf32, #tpu.memory_space<vmem>>, %arg7: memref<128x32xbf16, #tpu.memory_space<vmem>>, %arg8: memref<64x32xf32, #tpu.memory_space<vmem>>, %arg9: memref<64x32xf32, #tpu.memory_space<vmem>>, %arg10: memref<32x2xbf16, #tpu.memory_space<vmem>>, %arg11: memref<10x64xf32, #tpu.memory_space<vmem>>, %arg12: memref<10x64xf32, #tpu.memory_space<vmem>>, %arg13: memref<10x1xf32, #tpu.memory_space<vmem>>, %arg14: memref<10x2xf32, #tpu.memory_space<vmem>>) attributes {dimension_semantics = [], scalar_prefetch = 0 : i64, scratch_operands = 0 : i64, tpu.core_type = #tpu.core_type<tc>} {
    %c0 = arith.constant 0 : index
    %c0_0 = arith.constant 0 : index
    %0 = vector.load %arg2[%c0, %c0_0] : memref<16x32xf32, #tpu.memory_space<vmem>>, vector<16x32xf32>
    %c0_1 = arith.constant 0 : index
    %c0_2 = arith.constant 0 : index
    %1 = vector.load %arg1[%c0_1, %c0_2] : memref<32x512xf32, #tpu.memory_space<vmem>>, vector<32x512xf32>
    %cst = arith.constant dense<0.000000e+00> : vector<16x512xf32>
    %2 = tpu.matmul %0, %1, %cst {dimension_numbers = #tpu.dot_dimension_numbers<[1], [0], [0], [1], [0, 0, 1, 1], [], []>} : vector<16x32xf32>, vector<32x512xf32>, vector<16x512xf32> -> vector<16x512xf32>
    %c0_3 = arith.constant 0 : index
    %c0_4 = arith.constant 0 : index
    %3 = vector.load %arg3[%c0_3, %c0_4] : memref<16x1xf32, #tpu.memory_space<vmem>>, vector<16x1xf32>
    %4 = vector.broadcast %3 : vector<16x1xf32> to vector<16x512xf32>
    %5 = arith.addf %2, %4 : vector<16x512xf32>
    %c0_5 = arith.constant 0 : index
    %6 = memref.load %arg0[%c0_5] : memref<72xf32, #tpu.memory_space<smem>>
    %c1 = arith.constant 1 : index
    %7 = memref.load %arg0[%c1] : memref<72xf32, #tpu.memory_space<smem>>
    %c2 = arith.constant 2 : index
    %8 = memref.load %arg0[%c2] : memref<72xf32, #tpu.memory_space<smem>>
    %c3 = arith.constant 3 : index
    %9 = memref.load %arg0[%c3] : memref<72xf32, #tpu.memory_space<smem>>
    %c4 = arith.constant 4 : index
    %10 = memref.load %arg0[%c4] : memref<72xf32, #tpu.memory_space<smem>>
    %c5 = arith.constant 5 : index
    %11 = memref.load %arg0[%c5] : memref<72xf32, #tpu.memory_space<smem>>
    %c6 = arith.constant 6 : index
    %12 = memref.load %arg0[%c6] : memref<72xf32, #tpu.memory_space<smem>>
    %c7 = arith.constant 7 : index
    %13 = memref.load %arg0[%c7] : memref<72xf32, #tpu.memory_space<smem>>
    %14 = arith.addf %6, %10 : f32
    %15 = arith.addf %7, %11 : f32
    %16 = arith.addf %8, %12 : f32
    %17 = arith.addf %9, %13 : f32
    %18 = vector.broadcast %17 : f32 to vector<16x512xf32>
    %19 = arith.mulf %18, %5 : vector<16x512xf32>
    %20 = vector.broadcast %14 : f32 to vector<16x512xf32>
    %21 = arith.addf %20, %19 : vector<16x512xf32>
    %22 = arith.mulf %5, %21 : vector<16x512xf32>
    %cst_6 = arith.constant 0.000000e+00 : f32
    %23 = vector.broadcast %cst_6 : f32 to vector<16x512xf32>
    %24 = arith.maximumf %5, %23 : vector<16x512xf32>
    %25 = vector.broadcast %15 : f32 to vector<16x512xf32>
    %26 = arith.mulf %25, %24 : vector<16x512xf32>
    %27 = arith.addf %22, %26 : vector<16x512xf32>
    %28 = math.tanh %5 : vector<16x512xf32>
    %29 = vector.broadcast %16 : f32 to vector<16x512xf32>
    %30 = arith.mulf %29, %28 : vector<16x512xf32>
    %31 = arith.addf %27, %30 : vector<16x512xf32>
    %c12 = arith.constant 12 : index
    %32 = memref.load %arg0[%c12] : memref<72xf32, #tpu.memory_space<smem>>
    %c13 = arith.constant 13 : index
    %33 = memref.load %arg0[%c13] : memref<72xf32, #tpu.memory_space<smem>>
    %c14 = arith.constant 14 : index
    %34 = memref.load %arg0[%c14] : memref<72xf32, #tpu.memory_space<smem>>
    %c15 = arith.constant 15 : index
    %35 = memref.load %arg0[%c15] : memref<72xf32, #tpu.memory_space<smem>>
    %c16 = arith.constant 16 : index
    %36 = memref.load %arg0[%c16] : memref<72xf32, #tpu.memory_space<smem>>
    %c17 = arith.constant 17 : index
    %37 = memref.load %arg0[%c17] : memref<72xf32, #tpu.memory_space<smem>>
    %c18 = arith.constant 18 : index
    %38 = memref.load %arg0[%c18] : memref<72xf32, #tpu.memory_space<smem>>
    %c19 = arith.constant 19 : index
    %39 = memref.load %arg0[%c19] : memref<72xf32, #tpu.memory_space<smem>>
    %40 = arith.addf %32, %36 : f32
    %41 = arith.addf %33, %37 : f32
    %42 = arith.addf %34, %38 : f32
    %43 = arith.addf %35, %39 : f32
    %c20 = arith.constant 20 : index
    %44 = memref.load %arg0[%c20] : memref<72xf32, #tpu.memory_space<smem>>
    %c21 = arith.constant 21 : index
    %45 = memref.load %arg0[%c21] : memref<72xf32, #tpu.memory_space<smem>>
    %c22 = arith.constant 22 : index
    %46 = memref.load %arg0[%c22] : memref<72xf32, #tpu.memory_space<smem>>
    %c23 = arith.constant 23 : index
    %47 = memref.load %arg0[%c23] : memref<72xf32, #tpu.memory_space<smem>>
    %48 = vector.broadcast %43 : f32 to vector<16x512xf32>
    %49 = arith.mulf %48, %5 : vector<16x512xf32>
    %50 = vector.broadcast %40 : f32 to vector<16x512xf32>
    %51 = arith.addf %50, %49 : vector<16x512xf32>
    %52 = arith.mulf %5, %51 : vector<16x512xf32>
    %cst_7 = arith.constant 0.000000e+00 : f32
    %53 = vector.broadcast %cst_7 : f32 to vector<16x512xf32>
    %54 = arith.maximumf %5, %53 : vector<16x512xf32>
    %55 = vector.broadcast %41 : f32 to vector<16x512xf32>
    %56 = arith.mulf %55, %54 : vector<16x512xf32>
    %57 = arith.addf %52, %56 : vector<16x512xf32>
    %58 = math.tanh %5 : vector<16x512xf32>
    %59 = vector.broadcast %42 : f32 to vector<16x512xf32>
    %60 = arith.mulf %59, %58 : vector<16x512xf32>
    %61 = arith.addf %57, %60 : vector<16x512xf32>
    %62 = vector.broadcast %47 : f32 to vector<16x512xf32>
    %63 = arith.mulf %62, %31 : vector<16x512xf32>
    %64 = vector.broadcast %44 : f32 to vector<16x512xf32>
    %65 = arith.addf %64, %63 : vector<16x512xf32>
    %66 = arith.mulf %31, %65 : vector<16x512xf32>
    %cst_8 = arith.constant 0.000000e+00 : f32
    %67 = vector.broadcast %cst_8 : f32 to vector<16x512xf32>
    %68 = arith.maximumf %31, %67 : vector<16x512xf32>
    %69 = vector.broadcast %45 : f32 to vector<16x512xf32>
    %70 = arith.mulf %69, %68 : vector<16x512xf32>
    %71 = arith.addf %66, %70 : vector<16x512xf32>
    %72 = math.tanh %31 : vector<16x512xf32>
    %73 = vector.broadcast %46 : f32 to vector<16x512xf32>
    %74 = arith.mulf %73, %72 : vector<16x512xf32>
    %75 = arith.addf %71, %74 : vector<16x512xf32>
    %76 = arith.addf %61, %75 : vector<16x512xf32>
    %c0_9 = arith.constant 0 : index
    %c0_10 = arith.constant 0 : index
    %77 = vector.load %arg4[%c0_9, %c0_10] : memref<512x128xbf16, #tpu.memory_space<vmem>>, vector<512x128xbf16>
    %78 = arith.extf %77 : vector<512x128xbf16> to vector<512x128xf32>
    %cst_11 = arith.constant dense<0.000000e+00> : vector<16x128xf32>
    %79 = tpu.matmul %31, %78, %cst_11 {dimension_numbers = #tpu.dot_dimension_numbers<[1], [0], [0], [1], [0, 0, 1, 1], [], []>} : vector<16x512xf32>, vector<512x128xf32>, vector<16x128xf32> -> vector<16x128xf32>
    %cst_12 = arith.constant dense<0.000000e+00> : vector<16x128xf32>
    %80 = tpu.matmul %76, %78, %cst_12 {dimension_numbers = #tpu.dot_dimension_numbers<[1], [0], [0], [1], [0, 0, 1, 1], [], []>} : vector<16x512xf32>, vector<512x128xf32>, vector<16x128xf32> -> vector<16x128xf32>
    %c0_13 = arith.constant 0 : index
    %c0_14 = arith.constant 0 : index
    %81 = vector.load %arg5[%c0_13, %c0_14] : memref<32x16xf32, #tpu.memory_space<vmem>>, vector<32x16xf32>
    %cst_15 = arith.constant dense<0.000000e+00> : vector<32x128xf32>
    %82 = tpu.matmul %81, %79, %cst_15 {dimension_numbers = #tpu.dot_dimension_numbers<[1], [0], [0], [1], [0, 0, 1, 1], [], []>} : vector<32x16xf32>, vector<16x128xf32>, vector<32x128xf32> -> vector<32x128xf32>
    %c0_16 = arith.constant 0 : index
    %c0_17 = arith.constant 0 : index
    %83 = vector.load %arg6[%c0_16, %c0_17] : memref<32x16xf32, #tpu.memory_space<vmem>>, vector<32x16xf32>
    %cst_18 = arith.constant dense<0.000000e+00> : vector<32x128xf32>
    %84 = tpu.matmul %83, %80, %cst_18 {dimension_numbers = #tpu.dot_dimension_numbers<[1], [0], [0], [1], [0, 0, 1, 1], [], []>} : vector<32x16xf32>, vector<16x128xf32>, vector<32x128xf32> -> vector<32x128xf32>
    %85 = arith.addf %82, %84 : vector<32x128xf32>
    %c24 = arith.constant 24 : index
    %86 = memref.load %arg0[%c24] : memref<72xf32, #tpu.memory_space<smem>>
    %c25 = arith.constant 25 : index
    %87 = memref.load %arg0[%c25] : memref<72xf32, #tpu.memory_space<smem>>
    %c26 = arith.constant 26 : index
    %88 = memref.load %arg0[%c26] : memref<72xf32, #tpu.memory_space<smem>>
    %c27 = arith.constant 27 : index
    %89 = memref.load %arg0[%c27] : memref<72xf32, #tpu.memory_space<smem>>
    %c28 = arith.constant 28 : index
    %90 = memref.load %arg0[%c28] : memref<72xf32, #tpu.memory_space<smem>>
    %c29 = arith.constant 29 : index
    %91 = memref.load %arg0[%c29] : memref<72xf32, #tpu.memory_space<smem>>
    %c30 = arith.constant 30 : index
    %92 = memref.load %arg0[%c30] : memref<72xf32, #tpu.memory_space<smem>>
    %c31 = arith.constant 31 : index
    %93 = memref.load %arg0[%c31] : memref<72xf32, #tpu.memory_space<smem>>
    %94 = arith.addf %86, %90 : f32
    %95 = arith.addf %87, %91 : f32
    %96 = arith.addf %88, %92 : f32
    %97 = arith.addf %89, %93 : f32
    %98 = vector.broadcast %97 : f32 to vector<32x128xf32>
    %99 = arith.mulf %98, %85 : vector<32x128xf32>
    %100 = vector.broadcast %94 : f32 to vector<32x128xf32>
    %101 = arith.addf %100, %99 : vector<32x128xf32>
    %102 = arith.mulf %85, %101 : vector<32x128xf32>
    %cst_19 = arith.constant 0.000000e+00 : f32
    %103 = vector.broadcast %cst_19 : f32 to vector<32x128xf32>
    %104 = arith.maximumf %85, %103 : vector<32x128xf32>
    %105 = vector.broadcast %95 : f32 to vector<32x128xf32>
    %106 = arith.mulf %105, %104 : vector<32x128xf32>
    %107 = arith.addf %102, %106 : vector<32x128xf32>
    %108 = math.tanh %85 : vector<32x128xf32>
    %109 = vector.broadcast %96 : f32 to vector<32x128xf32>
    %110 = arith.mulf %109, %108 : vector<32x128xf32>
    %111 = arith.addf %107, %110 : vector<32x128xf32>
    %c36 = arith.constant 36 : index
    %112 = memref.load %arg0[%c36] : memref<72xf32, #tpu.memory_space<smem>>
    %c37 = arith.constant 37 : index
    %113 = memref.load %arg0[%c37] : memref<72xf32, #tpu.memory_space<smem>>
    %c38 = arith.constant 38 : index
    %114 = memref.load %arg0[%c38] : memref<72xf32, #tpu.memory_space<smem>>
    %c39 = arith.constant 39 : index
    %115 = memref.load %arg0[%c39] : memref<72xf32, #tpu.memory_space<smem>>
    %c40 = arith.constant 40 : index
    %116 = memref.load %arg0[%c40] : memref<72xf32, #tpu.memory_space<smem>>
    %c41 = arith.constant 41 : index
    %117 = memref.load %arg0[%c41] : memref<72xf32, #tpu.memory_space<smem>>
    %c42 = arith.constant 42 : index
    %118 = memref.load %arg0[%c42] : memref<72xf32, #tpu.memory_space<smem>>
    %c43 = arith.constant 43 : index
    %119 = memref.load %arg0[%c43] : memref<72xf32, #tpu.memory_space<smem>>
    %120 = arith.addf %112, %116 : f32
    %121 = arith.addf %113, %117 : f32
    %122 = arith.addf %114, %118 : f32
    %123 = arith.addf %115, %119 : f32
    %c44 = arith.constant 44 : index
    %124 = memref.load %arg0[%c44] : memref<72xf32, #tpu.memory_space<smem>>
    %c45 = arith.constant 45 : index
    %125 = memref.load %arg0[%c45] : memref<72xf32, #tpu.memory_space<smem>>
    %c46 = arith.constant 46 : index
    %126 = memref.load %arg0[%c46] : memref<72xf32, #tpu.memory_space<smem>>
    %c47 = arith.constant 47 : index
    %127 = memref.load %arg0[%c47] : memref<72xf32, #tpu.memory_space<smem>>
    %128 = vector.broadcast %123 : f32 to vector<32x128xf32>
    %129 = arith.mulf %128, %85 : vector<32x128xf32>
    %130 = vector.broadcast %120 : f32 to vector<32x128xf32>
    %131 = arith.addf %130, %129 : vector<32x128xf32>
    %132 = arith.mulf %85, %131 : vector<32x128xf32>
    %cst_20 = arith.constant 0.000000e+00 : f32
    %133 = vector.broadcast %cst_20 : f32 to vector<32x128xf32>
    %134 = arith.maximumf %85, %133 : vector<32x128xf32>
    %135 = vector.broadcast %121 : f32 to vector<32x128xf32>
    %136 = arith.mulf %135, %134 : vector<32x128xf32>
    %137 = arith.addf %132, %136 : vector<32x128xf32>
    %138 = math.tanh %85 : vector<32x128xf32>
    %139 = vector.broadcast %122 : f32 to vector<32x128xf32>
    %140 = arith.mulf %139, %138 : vector<32x128xf32>
    %141 = arith.addf %137, %140 : vector<32x128xf32>
    %142 = vector.broadcast %127 : f32 to vector<32x128xf32>
    %143 = arith.mulf %142, %111 : vector<32x128xf32>
    %144 = vector.broadcast %124 : f32 to vector<32x128xf32>
    %145 = arith.addf %144, %143 : vector<32x128xf32>
    %146 = arith.mulf %111, %145 : vector<32x128xf32>
    %cst_21 = arith.constant 0.000000e+00 : f32
    %147 = vector.broadcast %cst_21 : f32 to vector<32x128xf32>
    %148 = arith.maximumf %111, %147 : vector<32x128xf32>
    %149 = vector.broadcast %125 : f32 to vector<32x128xf32>
    %150 = arith.mulf %149, %148 : vector<32x128xf32>
    %151 = arith.addf %146, %150 : vector<32x128xf32>
    %152 = math.tanh %111 : vector<32x128xf32>
    %153 = vector.broadcast %126 : f32 to vector<32x128xf32>
    %154 = arith.mulf %153, %152 : vector<32x128xf32>
    %155 = arith.addf %151, %154 : vector<32x128xf32>
    %156 = arith.addf %141, %155 : vector<32x128xf32>
    %c0_22 = arith.constant 0 : index
    %c0_23 = arith.constant 0 : index
    %157 = vector.load %arg7[%c0_22, %c0_23] : memref<128x32xbf16, #tpu.memory_space<vmem>>, vector<128x32xbf16>
    %158 = arith.extf %157 : vector<128x32xbf16> to vector<128x32xf32>
    %cst_24 = arith.constant dense<0.000000e+00> : vector<32x32xf32>
    %159 = tpu.matmul %111, %158, %cst_24 {dimension_numbers = #tpu.dot_dimension_numbers<[1], [0], [0], [1], [0, 0, 1, 1], [], []>} : vector<32x128xf32>, vector<128x32xf32>, vector<32x32xf32> -> vector<32x32xf32>
    %cst_25 = arith.constant dense<0.000000e+00> : vector<32x32xf32>
    %160 = tpu.matmul %156, %158, %cst_25 {dimension_numbers = #tpu.dot_dimension_numbers<[1], [0], [0], [1], [0, 0, 1, 1], [], []>} : vector<32x128xf32>, vector<128x32xf32>, vector<32x32xf32> -> vector<32x32xf32>
    %c0_26 = arith.constant 0 : index
    %c0_27 = arith.constant 0 : index
    %161 = vector.load %arg8[%c0_26, %c0_27] : memref<64x32xf32, #tpu.memory_space<vmem>>, vector<64x32xf32>
    %cst_28 = arith.constant dense<0.000000e+00> : vector<64x32xf32>
    %162 = tpu.matmul %161, %159, %cst_28 {dimension_numbers = #tpu.dot_dimension_numbers<[1], [0], [0], [1], [0, 0, 1, 1], [], []>} : vector<64x32xf32>, vector<32x32xf32>, vector<64x32xf32> -> vector<64x32xf32>
    %c0_29 = arith.constant 0 : index
    %c0_30 = arith.constant 0 : index
    %163 = vector.load %arg9[%c0_29, %c0_30] : memref<64x32xf32, #tpu.memory_space<vmem>>, vector<64x32xf32>
    %cst_31 = arith.constant dense<0.000000e+00> : vector<64x32xf32>
    %164 = tpu.matmul %163, %160, %cst_31 {dimension_numbers = #tpu.dot_dimension_numbers<[1], [0], [0], [1], [0, 0, 1, 1], [], []>} : vector<64x32xf32>, vector<32x32xf32>, vector<64x32xf32> -> vector<64x32xf32>
    %165 = arith.addf %162, %164 : vector<64x32xf32>
    %c48 = arith.constant 48 : index
    %166 = memref.load %arg0[%c48] : memref<72xf32, #tpu.memory_space<smem>>
    %c49 = arith.constant 49 : index
    %167 = memref.load %arg0[%c49] : memref<72xf32, #tpu.memory_space<smem>>
    %c50 = arith.constant 50 : index
    %168 = memref.load %arg0[%c50] : memref<72xf32, #tpu.memory_space<smem>>
    %c51 = arith.constant 51 : index
    %169 = memref.load %arg0[%c51] : memref<72xf32, #tpu.memory_space<smem>>
    %c52 = arith.constant 52 : index
    %170 = memref.load %arg0[%c52] : memref<72xf32, #tpu.memory_space<smem>>
    %c53 = arith.constant 53 : index
    %171 = memref.load %arg0[%c53] : memref<72xf32, #tpu.memory_space<smem>>
    %c54 = arith.constant 54 : index
    %172 = memref.load %arg0[%c54] : memref<72xf32, #tpu.memory_space<smem>>
    %c55 = arith.constant 55 : index
    %173 = memref.load %arg0[%c55] : memref<72xf32, #tpu.memory_space<smem>>
    %174 = arith.addf %166, %170 : f32
    %175 = arith.addf %167, %171 : f32
    %176 = arith.addf %168, %172 : f32
    %177 = arith.addf %169, %173 : f32
    %178 = vector.broadcast %177 : f32 to vector<64x32xf32>
    %179 = arith.mulf %178, %165 : vector<64x32xf32>
    %180 = vector.broadcast %174 : f32 to vector<64x32xf32>
    %181 = arith.addf %180, %179 : vector<64x32xf32>
    %182 = arith.mulf %165, %181 : vector<64x32xf32>
    %cst_32 = arith.constant 0.000000e+00 : f32
    %183 = vector.broadcast %cst_32 : f32 to vector<64x32xf32>
    %184 = arith.maximumf %165, %183 : vector<64x32xf32>
    %185 = vector.broadcast %175 : f32 to vector<64x32xf32>
    %186 = arith.mulf %185, %184 : vector<64x32xf32>
    %187 = arith.addf %182, %186 : vector<64x32xf32>
    %188 = math.tanh %165 : vector<64x32xf32>
    %189 = vector.broadcast %176 : f32 to vector<64x32xf32>
    %190 = arith.mulf %189, %188 : vector<64x32xf32>
    %191 = arith.addf %187, %190 : vector<64x32xf32>
    %c60 = arith.constant 60 : index
    %192 = memref.load %arg0[%c60] : memref<72xf32, #tpu.memory_space<smem>>
    %c61 = arith.constant 61 : index
    %193 = memref.load %arg0[%c61] : memref<72xf32, #tpu.memory_space<smem>>
    %c62 = arith.constant 62 : index
    %194 = memref.load %arg0[%c62] : memref<72xf32, #tpu.memory_space<smem>>
    %c63 = arith.constant 63 : index
    %195 = memref.load %arg0[%c63] : memref<72xf32, #tpu.memory_space<smem>>
    %c64 = arith.constant 64 : index
    %196 = memref.load %arg0[%c64] : memref<72xf32, #tpu.memory_space<smem>>
    %c65 = arith.constant 65 : index
    %197 = memref.load %arg0[%c65] : memref<72xf32, #tpu.memory_space<smem>>
    %c66 = arith.constant 66 : index
    %198 = memref.load %arg0[%c66] : memref<72xf32, #tpu.memory_space<smem>>
    %c67 = arith.constant 67 : index
    %199 = memref.load %arg0[%c67] : memref<72xf32, #tpu.memory_space<smem>>
    %200 = arith.addf %192, %196 : f32
    %201 = arith.addf %193, %197 : f32
    %202 = arith.addf %194, %198 : f32
    %203 = arith.addf %195, %199 : f32
    %c68 = arith.constant 68 : index
    %204 = memref.load %arg0[%c68] : memref<72xf32, #tpu.memory_space<smem>>
    %c69 = arith.constant 69 : index
    %205 = memref.load %arg0[%c69] : memref<72xf32, #tpu.memory_space<smem>>
    %c70 = arith.constant 70 : index
    %206 = memref.load %arg0[%c70] : memref<72xf32, #tpu.memory_space<smem>>
    %c71 = arith.constant 71 : index
    %207 = memref.load %arg0[%c71] : memref<72xf32, #tpu.memory_space<smem>>
    %208 = vector.broadcast %203 : f32 to vector<64x32xf32>
    %209 = arith.mulf %208, %165 : vector<64x32xf32>
    %210 = vector.broadcast %200 : f32 to vector<64x32xf32>
    %211 = arith.addf %210, %209 : vector<64x32xf32>
    %212 = arith.mulf %165, %211 : vector<64x32xf32>
    %cst_33 = arith.constant 0.000000e+00 : f32
    %213 = vector.broadcast %cst_33 : f32 to vector<64x32xf32>
    %214 = arith.maximumf %165, %213 : vector<64x32xf32>
    %215 = vector.broadcast %201 : f32 to vector<64x32xf32>
    %216 = arith.mulf %215, %214 : vector<64x32xf32>
    %217 = arith.addf %212, %216 : vector<64x32xf32>
    %218 = math.tanh %165 : vector<64x32xf32>
    %219 = vector.broadcast %202 : f32 to vector<64x32xf32>
    %220 = arith.mulf %219, %218 : vector<64x32xf32>
    %221 = arith.addf %217, %220 : vector<64x32xf32>
    %222 = vector.broadcast %207 : f32 to vector<64x32xf32>
    %223 = arith.mulf %222, %191 : vector<64x32xf32>
    %224 = vector.broadcast %204 : f32 to vector<64x32xf32>
    %225 = arith.addf %224, %223 : vector<64x32xf32>
    %226 = arith.mulf %191, %225 : vector<64x32xf32>
    %cst_34 = arith.constant 0.000000e+00 : f32
    %227 = vector.broadcast %cst_34 : f32 to vector<64x32xf32>
    %228 = arith.maximumf %191, %227 : vector<64x32xf32>
    %229 = vector.broadcast %205 : f32 to vector<64x32xf32>
    %230 = arith.mulf %229, %228 : vector<64x32xf32>
    %231 = arith.addf %226, %230 : vector<64x32xf32>
    %232 = math.tanh %191 : vector<64x32xf32>
    %233 = vector.broadcast %206 : f32 to vector<64x32xf32>
    %234 = arith.mulf %233, %232 : vector<64x32xf32>
    %235 = arith.addf %231, %234 : vector<64x32xf32>
    %236 = arith.addf %221, %235 : vector<64x32xf32>
    %c0_35 = arith.constant 0 : index
    %c0_36 = arith.constant 0 : index
    %237 = vector.load %arg10[%c0_35, %c0_36] : memref<32x2xbf16, #tpu.memory_space<vmem>>, vector<32x2xbf16>
    %238 = arith.extf %237 : vector<32x2xbf16> to vector<32x2xf32>
    %cst_37 = arith.constant dense<0.000000e+00> : vector<64x2xf32>
    %239 = tpu.matmul %191, %238, %cst_37 {dimension_numbers = #tpu.dot_dimension_numbers<[1], [0], [0], [1], [0, 0, 1, 1], [], []>} : vector<64x32xf32>, vector<32x2xf32>, vector<64x2xf32> -> vector<64x2xf32>
    %cst_38 = arith.constant dense<0.000000e+00> : vector<64x2xf32>
    %240 = tpu.matmul %236, %238, %cst_38 {dimension_numbers = #tpu.dot_dimension_numbers<[1], [0], [0], [1], [0, 0, 1, 1], [], []>} : vector<64x32xf32>, vector<32x2xf32>, vector<64x2xf32> -> vector<64x2xf32>
    %c0_39 = arith.constant 0 : index
    %c0_40 = arith.constant 0 : index
    %241 = vector.load %arg11[%c0_39, %c0_40] : memref<10x64xf32, #tpu.memory_space<vmem>>, vector<10x64xf32>
    %cst_41 = arith.constant dense<0.000000e+00> : vector<10x2xf32>
    %242 = tpu.matmul %241, %239, %cst_41 {dimension_numbers = #tpu.dot_dimension_numbers<[1], [0], [0], [1], [0, 0, 1, 1], [], []>} : vector<10x64xf32>, vector<64x2xf32>, vector<10x2xf32> -> vector<10x2xf32>
    %c0_42 = arith.constant 0 : index
    %c0_43 = arith.constant 0 : index
    %243 = vector.load %arg12[%c0_42, %c0_43] : memref<10x64xf32, #tpu.memory_space<vmem>>, vector<10x64xf32>
    %cst_44 = arith.constant dense<0.000000e+00> : vector<10x2xf32>
    %244 = tpu.matmul %243, %240, %cst_44 {dimension_numbers = #tpu.dot_dimension_numbers<[1], [0], [0], [1], [0, 0, 1, 1], [], []>} : vector<10x64xf32>, vector<64x2xf32>, vector<10x2xf32> -> vector<10x2xf32>
    %245 = arith.addf %242, %244 : vector<10x2xf32>
    %c0_45 = arith.constant 0 : index
    %c0_46 = arith.constant 0 : index
    %246 = vector.load %arg13[%c0_45, %c0_46] : memref<10x1xf32, #tpu.memory_space<vmem>>, vector<10x1xf32>
    %247 = vector.broadcast %246 : vector<10x1xf32> to vector<10x2xf32>
    %248 = arith.addf %245, %247 : vector<10x2xf32>
    %c0_47 = arith.constant 0 : index
    %c0_48 = arith.constant 0 : index
    %249 = vector.load %arg14[%c0_47, %c0_48] : memref<10x2xf32, #tpu.memory_space<vmem>>, vector<10x2xf32>
    tpu.vector_store %arg14[%c0_47, %c0_48], %248 {strides = array<i32>} : memref<10x2xf32, #tpu.memory_space<vmem>>, vector<10x2xf32>,
    return
  }
}

</mosaic_0001>

<llo_original>
// kernel: forward.1
$region0: #{forward.1}
  #allocation0 [shape = 'u32[]', space=smem, size = 0x4, offset = 0x4, fixed_abs, tag = 'smem constant byte address 0x4 - core index']
  #allocation1 [shape = 'u32[144,128]{1,0:T(1,128)}', space=vmem, size = 0x12000, scoped, tag = 'internal scratch']
  %s0 = inlined_call_operand.vmem [shape: f32[72], index: 0, kind: input, shape index: {}]
  %s1 = inlined_call_operand.vmem [shape: f32[32,512], index: 1, kind: input, shape index: {}]
  %s2 = inlined_call_operand.vmem [shape: f32[16,32], index: 2, kind: input, shape index: {}]
  %s3 = inlined_call_operand.vmem [shape: f32[16,1], index: 3, kind: input, shape index: {}]
  %s4 = inlined_call_operand.vmem [shape: bf16[512,128], index: 4, kind: input, shape index: {}]
  %s5 = inlined_call_operand.vmem [shape: f32[32,16], index: 5, kind: input, shape index: {}]
  %s6 = inlined_call_operand.vmem [shape: f32[32,16], index: 6, kind: input, shape index: {}]
  %s7 = inlined_call_operand.vmem [shape: bf16[128,32], index: 7, kind: input, shape index: {}]
  %s8 = inlined_call_operand.vmem [shape: f32[64,32], index: 8, kind: input, shape index: {}]
  %s9 = inlined_call_operand.vmem [shape: f32[64,32], index: 9, kind: input, shape index: {}]
  %s10 = inlined_call_operand.vmem [shape: bf16[32,2], index: 10, kind: input, shape index: {}]
  %s11 = inlined_call_operand.vmem [shape: f32[10,64], index: 11, kind: input, shape index: {}]
  %s12 = inlined_call_operand.vmem [shape: f32[10,64], index: 12, kind: input, shape index: {}]
  %s13 = inlined_call_operand.vmem [shape: f32[10,1], index: 13, kind: input, shape index: {}]
  %s14 = inlined_call_operand.vmem [shape: f32[10,2], index: 14, kind: output, shape index: {}]
  %s15 = sld [smem:[#allocation0]]
  $region70: #{forward.1} parent=0
    _
  %s17 = ssub.s32 1, %s15
  %s18 = scalar_select 0, %s17, %s15
  $region1: #{forward.1} parent=0
    #allocation2 [shape = 'u8[512]{0}', space=smem, size = 0x200, scoped, tag = 'input window, operand 0, single buffered']
    #allocation3 [shape = 's32[1]{0}', space=sflag, size = 0x4, scoped, tag = 'scoped memory for forward.1']
    %19 = vsyncpa [#allocation3], 0
    // Predicated region
    $region2: #{forward.1} parent=1 // pred_check
      _
    $region3: #{forward.1} parent=1 // pred_check_branch
      %21 = sbr.rel (0) target = $region5
    $region4: #{forward.1} parent=1 // pred_region
      %s23 = ssub.s32 16, 16
      %24 = vsyncadd [#allocation3], %s23
      %s26 = sshll.u32 %s0, 4
      %s27 = int_to_ptr.vmem [resolvable:$true] %s26
      %29 = dma.vmem_to_smem %s27, 16, [#allocation2], [#allocation3]
    $region5: #{forward.1} parent=1 // pred_fallthru
      _
    // Predicated region
    $region6: #{forward.1} parent=1 // pred_check
      _
    $region7: #{forward.1} parent=1 // pred_check_branch
      %31 = sbr.rel (0) target = $region9
    $region8: #{forward.1} parent=1 // pred_region
      _
    $region9: #{forward.1} parent=1 // pred_fallthru
      _
    // Predicated region
    $region10: #{forward.1} parent=1 // pred_check
      _
    $region11: #{forward.1} parent=1 // pred_check_branch
      %33 = sbr.rel (0) target = $region13
    $region12: #{forward.1} parent=1 // pred_region
      _
    $region13: #{forward.1} parent=1 // pred_fallthru
      _
    // Predicated region
    $region14: #{forward.1} parent=1 // pred_check
      _
    $region15: #{forward.1} parent=1 // pred_check_branch
      %35 = sbr.rel (0) target = $region17
    $region16: #{forward.1} parent=1 // pred_region
      _
    $region17: #{forward.1} parent=1 // pred_fallthru
      _
    // Predicated region
    $region18: #{forward.1} parent=1 // pred_check
      _
    $region19: #{forward.1} parent=1 // pred_check_branch
      %37 = sbr.rel (0) target = $region21
    $region20: #{forward.1} parent=1 // pred_region
      _
    $region21: #{forward.1} parent=1 // pred_fallthru
      _
    // Predicated region
    $region22: #{forward.1} parent=1 // pred_check
      _
    $region23: #{forward.1} parent=1 // pred_check_branch
      %39 = sbr.rel (0) target = $region25
    $region24: #{forward.1} parent=1 // pred_region
      _
    $region25: #{forward.1} parent=1 // pred_fallthru
      _
    // Predicated region
    $region26: #{forward.1} parent=1 // pred_check
      _
    $region27: #{forward.1} parent=1 // pred_check_branch
      %41 = sbr.rel (0) target = $region29
    $region28: #{forward.1} parent=1 // pred_region
      _
    $region29: #{forward.1} parent=1 // pred_fallthru
      _
    // Predicated region
    $region30: #{forward.1} parent=1 // pred_check
      _
    $region31: #{forward.1} parent=1 // pred_check_branch
      %43 = sbr.rel (0) target = $region33
    $region32: #{forward.1} parent=1 // pred_region
      _
    $region33: #{forward.1} parent=1 // pred_fallthru
      _
    // Predicated region
    $region34: #{forward.1} parent=1 // pred_check
      _
    $region35: #{forward.1} parent=1 // pred_check_branch
      %45 = sbr.rel (0) target = $region37
    $region36: #{forward.1} parent=1 // pred_region
      _
    $region37: #{forward.1} parent=1 // pred_fallthru
      _
    // Predicated region
    $region38: #{forward.1} parent=1 // pred_check
      _
    $region39: #{forward.1} parent=1 // pred_check_branch
      %47 = sbr.rel (0) target = $region41
    $region40: #{forward.1} parent=1 // pred_region
      _
    $region41: #{forward.1} parent=1 // pred_fallthru
      _
    // Predicated region
    $region42: #{forward.1} parent=1 // pred_check
      _
    $region43: #{forward.1} parent=1 // pred_check_branch
      %49 = sbr.rel (0) target = $region45
    $region44: #{forward.1} parent=1 // pred_region
      _
    $region45: #{forward.1} parent=1 // pred_fallthru
      _
    // Predicated region
    $region46: #{forward.1} parent=1 // pred_check
      _
    $region47: #{forward.1} parent=1 // pred_check_branch
      %51 = sbr.rel (0) target = $region49
    $region48: #{forward.1} parent=1 // pred_region
      _
    $region49: #{forward.1} parent=1 // pred_fallthru
      _
    // Predicated region
    $region50: #{forward.1} parent=1 // pred_check
      _
    $region51: #{forward.1} parent=1 // pred_check_branch
      %53 = sbr.rel (0) target = $region53
    $region52: #{forward.1} parent=1 // pred_region
      _
    $region53: #{forward.1} parent=1 // pred_fallthru
      _
    // Predicated region
    $region54: #{forward.1} parent=1 // pred_check
      _
    $region55: #{forward.1} parent=1 // pred_check_branch
      %55 = sbr.rel (0) target = $region57
    $region56: #{forward.1} parent=1 // pred_region
      _
    $region57: #{forward.1} parent=1 // pred_fallthru
      _
    // Predicated region
    $region58: #{forward.1} parent=1 // pred_check
      _
    $region59: #{forward.1} parent=1 // pred_check_branch
      %57 = sbr.rel (0) target = $region61
    $region60: #{forward.1} parent=1 // pred_region
      %58 = dma.done [#allocation3], 16
    $region61: #{forward.1} parent=1 // pred_fallthru
      _
    %59 = sfence
    %v60 = vld [vmem:[%s2] sm:$0xff]
    %v61 = vld [vmem:[%s2 + $0x8] sm:$0xff]
    %v62 = vld [vmem:[%s1] sm:$0xff]
    %v63 = vld [vmem:[%s1 + $0x8] sm:$0xff]
    %v64 = vld [vmem:[%s1 + $0x10] sm:$0xff]
    %v65 = vld [vmem:[%s1 + $0x18] sm:$0xff]
    %v66 = vld [vmem:[%s1 + $0x20] sm:$0xff]
    %v67 = vld [vmem:[%s1 + $0x28] sm:$0xff]
    %v68 = vld [vmem:[%s1 + $0x30] sm:$0xff]
    %v69 = vld [vmem:[%s1 + $0x38] sm:$0xff]
    %v70 = vld [vmem:[%s1 + $0x40] sm:$0xff]
    %v71 = vld [vmem:[%s1 + $0x48] sm:$0xff]
    %v72 = vld [vmem:[%s1 + $0x50] sm:$0xff]
    %v73 = vld [vmem:[%s1 + $0x58] sm:$0xff]
    %v74 = vld [vmem:[%s1 + $0x60] sm:$0xff]
    %v75 = vld [vmem:[%s1 + $0x68] sm:$0xff]
    %v76 = vld [vmem:[%s1 + $0x70] sm:$0xff]
    %v77 = vld [vmem:[%s1 + $0x78] sm:$0xff]
    %v78 = vld [vmem:[%s3] sm:$0xff]
    %v79 = vld [vmem:[%s3 + $0x8] sm:$0xff]
    %81 = vset.pattern.permute.xlu0 0
    %82 = vperm.xlu0 %81, %v78
    %v83 = vpop.permute.xlu0 %82
    %86 = vset.pattern.permute.xlu0 0
    %87 = vperm.xlu0 %86, %v79
    %v88 = vpop.permute.xlu0 %87
    %vm90 = vcmask 261120
    %v92 = vsel %vm90, %v60, 0
    %v95 = vsel %vm90, %v61, 0
    %97 = vmatprep.subr.mxu0 0.0
    %98 = vmatpush1.msra.mxu0 0.0
    %99 = vmatprep.subr.mxu0 0.0
    %100 = vmatpush1.msra.mxu0 0.0
    %101 = vmatprep.subr.mxu0 0.0
    %102 = vmatpush1.msra.mxu0 0.0
    %103 = vmatprep.subr.mxu0 0.0
    %104 = vmatpush1.msra.mxu0 0.0
    %105 = vmatprep.subr.mxu0 0.0
    %106 = vmatpush1.msra.mxu0 0.0
    %107 = vmatprep.subr.mxu0 0.0
    %108 = vmatpush1.msra.mxu0 0.0
    %109 = vmatprep.subr.mxu0 0.0
    %110 = vmatpush1.msra.mxu0 0.0
    %111 = vmatprep.subr.mxu0 0.0
    %112 = vmatpush1.msra.mxu0 0.0
    %113 = vmatprep.subr.mxu0 0.0
    %114 = vmatpush1.msra.mxu0 0.0
    %115 = vmatprep.subr.mxu0 0.0
    %116 = vmatpush1.msra.mxu0 0.0
    %117 = vmatprep.subr.mxu0 0.0
    %118 = vmatpush1.msra.mxu0 0.0
    %119 = vmatprep.subr.mxu0 0.0
    %120 = vmatpush1.msra.mxu0 0.0
    %121 = vmatprep.subr.mxu0 %v75
    %122 = vmatpush1.msra.mxu0 %v74
    %123 = vmatprep.subr.mxu0 %v71
    %124 = vmatpush1.msra.mxu0 %v70
    %125 = vmatprep.subr.mxu0 %v67
    %126 = vmatpush1.msra.mxu0 %v66
    %127 = vmatprep.subr.mxu0 %v63
    %128 = vmatpush1.msra.mxu0 %v62
    %129 = vmatprep.subr.mxu0 0.0
    %130 = vmatpush2.msra.mxu0 0.0
    %131 = vmatprep.subr.mxu0 0.0
    %132 = vmatpush2.msra.mxu0 0.0
    %133 = vmatprep.subr.mxu0 0.0
    %134 = vmatpush2.msra.mxu0 0.0
    %135 = vmatprep.subr.mxu0 0.0
    %136 = vmatpush2.msra.mxu0 0.0
    %137 = vmatprep.subr.mxu0 0.0
    %138 = vmatpush2.msra.mxu0 0.0
    %139 = vmatprep.subr.mxu0 0.0
    %140 = vmatpush2.msra.mxu0 0.0
    %141 = vmatprep.subr.mxu0 0.0
    %142 = vmatpush2.msra.mxu0 0.0
    %143 = vmatprep.subr.mxu0 0.0
    %144 = vmatpush2.msra.mxu0 0.0
    %145 = vmatprep.subr.mxu0 0.0
    %146 = vmatpush2.msra.mxu0 0.0
    %147 = vmatprep.subr.mxu0 0.0
    %148 = vmatpush2.msra.mxu0 0.0
    %149 = vmatprep.subr.mxu0 0.0
    %150 = vmatpush2.msra.mxu0 0.0
    %151 = vmatprep.subr.mxu0 0.0
    %152 = vmatpush2.msra.mxu0 0.0
    %153 = vmatprep.subr.mxu0 0.0
    %154 = vmatpush2.msra.mxu0 0.0
    %155 = vmatprep.subr.mxu0 0.0
    %156 = vmatpush2.msra.mxu0 0.0
    %157 = vmatprep.subr.mxu0 0.0
    %158 = vmatpush2.msra.mxu0 0.0
    %159 = vmatprep.subr.mxu0 0.0
    %160 = vmatpush2.msra.mxu0 0.0
    %161 = vmatprep.mubr.f32.mxu0 0.0
    %162 = vmatmul.mubr.f32.gmra.mxu0 %v92
    %v163 = vpop.f32.mrf.mxu0
    %v164 = vadd.f32 %v83, %v163
    %v165 = vpop.f32.mrf.mxu0
    %v166 = vadd.f32 %v83, %v165
    %167 = vmatprep.mubr.f32.mxu0 0.0
    %168 = vmatmul.mubr.f32.gmra.mxu0 %v95
    %v169 = vpop.f32.mrf.mxu0
    %v170 = vadd.f32 %v88, %v169
    %v171 = vpop.f32.mrf.mxu0
    %v172 = vadd.f32 %v88, %v171
    %173 = vdwg.mxu0
    %174 = vmatprep.subr.mxu0 0.0
    %175 = vmatpush1.msra.mxu0 0.0
    %176 = vmatprep.subr.mxu0 0.0
    %177 = vmatpush1.msra.mxu0 0.0
    %178 = vmatprep.subr.mxu0 0.0
    %179 = vmatpush1.msra.mxu0 0.0
    %180 = vmatprep.subr.mxu0 0.0
    %181 = vmatpush1.msra.mxu0 0.0
    %182 = vmatprep.subr.mxu0 0.0
    %183 = vmatpush1.msra.mxu0 0.0
    %184 = vmatprep.subr.mxu0 0.0
    %185 = vmatpush1.msra.mxu0 0.0
    %186 = vmatprep.subr.mxu0 0.0
    %187 = vmatpush1.msra.mxu0 0.0
    %188 = vmatprep.subr.mxu0 0.0
    %189 = vmatpush1.msra.mxu0 0.0
    %190 = vmatprep.subr.mxu0 0.0
    %191 = vmatpush1.msra.mxu0 0.0
    %192 = vmatprep.subr.mxu0 0.0
    %193 = vmatpush1.msra.mxu0 0.0
    %194 = vmatprep.subr.mxu0 0.0
    %195 = vmatpush1.msra.mxu0 0.0
    %196 = vmatprep.subr.mxu0 0.0
    %197 = vmatpush1.msra.mxu0 0.0
    %198 = vmatprep.subr.mxu0 %v77
    %199 = vmatpush1.msra.mxu0 %v76
    %200 = vmatprep.subr.mxu0 %v73
    %201 = vmatpush1.msra.mxu0 %v72
    %202 = vmatprep.subr.mxu0 %v69
    %203 = vmatpush1.msra.mxu0 %v68
    %204 = vmatprep.subr.mxu0 %v65
    %205 = vmatpush1.msra.mxu0 %v64
    %206 = vmatprep.subr.mxu0 0.0
    %207 = vmatpush2.msra.mxu0 0.0
    %208 = vmatprep.subr.mxu0 0.0
    %209 = vmatpush2.msra.mxu0 0.0
    %210 = vmatprep.subr.mxu0 0.0
    %211 = vmatpush2.msra.mxu0 0.0
    %212 = vmatprep.subr.mxu0 0.0
    %213 = vmatpush2.msra.mxu0 0.0
    %214 = vmatprep.subr.mxu0 0.0
    %215 = vmatpush2.msra.mxu0 0.0
    %216 = vmatprep.subr.mxu0 0.0
    %217 = vmatpush2.msra.mxu0 0.0
    %218 = vmatprep.subr.mxu0 0.0
    %219 = vmatpush2.msra.mxu0 0.0
    %220 = vmatprep.subr.mxu0 0.0
    %221 = vmatpush2.msra.mxu0 0.0
    %222 = vmatprep.subr.mxu0 0.0
    %223 = vmatpush2.msra.mxu0 0.0
    %224 = vmatprep.subr.mxu0 0.0
    %225 = vmatpush2.msra.mxu0 0.0
    %226 = vmatprep.subr.mxu0 0.0
    %227 = vmatpush2.msra.mxu0 0.0
    %228 = vmatprep.subr.mxu0 0.0
    %229 = vmatpush2.msra.mxu0 0.0
    %230 = vmatprep.subr.mxu0 0.0
    %231 = vmatpush2.msra.mxu0 0.0
    %232 = vmatprep.subr.mxu0 0.0
    %233 = vmatpush2.msra.mxu0 0.0
    %234 = vmatprep.subr.mxu0 0.0
    %235 = vmatpush2.msra.mxu0 0.0
    %236 = vmatprep.subr.mxu0 0.0
    %237 = vmatpush2.msra.mxu0 0.0
    %238 = vmatprep.mubr.f32.mxu0 0.0
    %239 = vmatmul.mubr.f32.gmra.mxu0 %v92
    %v240 = vpop.f32.mrf.mxu0
    %v241 = vadd.f32 %v83, %v240
    %v242 = vpop.f32.mrf.mxu0
    %v243 = vadd.f32 %v83, %v242
    %244 = vmatprep.mubr.f32.mxu0 0.0
    %245 = vmatmul.mubr.f32.gmra.mxu0 %v95
    %v246 = vpop.f32.mrf.mxu0
    %v247 = vadd.f32 %v88, %v246
    %v248 = vpop.f32.mrf.mxu0
    %v249 = vadd.f32 %v88, %v248
    %250 = vdwg.mxu0
    %s251 = sld [smem:[#allocation2]]
    %s252 = sld [smem:[#allocation2 + $0x1]]
    %s253 = sld [smem:[#allocation2 + $0x2]]
    %s254 = sld [smem:[#allocation2 + $0x3]]
    %s255 = sld [smem:[#allocation2 + $0x4]]
    %s256 = sld [smem:[#allocation2 + $0x5]]
    %s257 = sld [smem:[#allocation2 + $0x6]]
    %s258 = sld [smem:[#allocation2 + $0x7]]
    %s259 = sadd.f32 %s251, %s255
    %s260 = sadd.f32 %s252, %s256
    %s261 = sadd.f32 %s253, %s257
    %s262 = sadd.f32 %s254, %s258
    %v263 = vstv %s262
    %v264 = vmul.f32 %v263, %v164
    %v265 = vmul.f32 %v263, %v166
    %v266 = vmul.f32 %v263, %v241
    %v267 = vmul.f32 %v263, %v243
    %v268 = vmul.f32 %v263, %v170
    %v269 = vmul.f32 %v263, %v172
    %v270 = vmul.f32 %v263, %v247
    %v271 = vmul.f32 %v263, %v249
    %v272 = vstv %s259
    %v273 = vadd.f32 %v272, %v264
    %v274 = vadd.f32 %v272, %v265
    %v275 = vadd.f32 %v272, %v266
    %v276 = vadd.f32 %v272, %v267
    %v277 = vadd.f32 %v272, %v268
    %v278 = vadd.f32 %v272, %v269
    %v279 = vadd.f32 %v272, %v270
    %v280 = vadd.f32 %v272, %v271
    %v281 = vmul.f32 %v164, %v273
    %v282 = vmul.f32 %v166, %v274
    %v283 = vmul.f32 %v241, %v275
    %v284 = vmul.f32 %v243, %v276
    %v285 = vmul.f32 %v170, %v277
    %v286 = vmul.f32 %v172, %v278
    %v287 = vmul.f32 %v247, %v279
    %v288 = vmul.f32 %v249, %v280
    %v289 = vmax.f32 %v164, 0.0
    %v290 = vmax.f32 %v166, 0.0
    %v291 = vmax.f32 %v241, 0.0
    %v292 = vmax.f32 %v243, 0.0
    %v293 = vmax.f32 %v170, 0.0
    %v294 = vmax.f32 %v172, 0.0
    %v295 = vmax.f32 %v247, 0.0
    %v296 = vmax.f32 %v249, 0.0
    %v297 = vstv %s260
    %v298 = vmul.f32 %v297, %v289
    %v299 = vmul.f32 %v297, %v290
    %v300 = vmul.f32 %v297, %v291
    %v301 = vmul.f32 %v297, %v292
    %v302 = vmul.f32 %v297, %v293
    %v303 = vmul.f32 %v297, %v294
    %v304 = vmul.f32 %v297, %v295
    %v305 = vmul.f32 %v297, %v296
    %v306 = vadd.f32 %v281, %v298
    %v307 = vadd.f32 %v282, %v299
    %v308 = vadd.f32 %v283, %v300
    %v309 = vadd.f32 %v284, %v301
    %v310 = vadd.f32 %v285, %v302
    %v311 = vadd.f32 %v286, %v303
    %v312 = vadd.f32 %v287, %v304
    %v313 = vadd.f32 %v288, %v305
    %v314 = vtanh.pop %v164
    %v315 = vtanh.pop %v166
    %v316 = vtanh.pop %v241
    %v317 = vtanh.pop %v243
    %v318 = vtanh.pop %v170
    %v319 = vtanh.pop %v172
    %v320 = vtanh.pop %v247
    %v321 = vtanh.pop %v249
    %v322 = vstv %s261
    %v323 = vmul.f32 %v322, %v314
    %v324 = vmul.f32 %v322, %v315
    %v325 = vmul.f32 %v322, %v316
    %v326 = vmul.f32 %v322, %v317
    %v327 = vmul.f32 %v322, %v318
    %v328 = vmul.f32 %v322, %v319
    %v329 = vmul.f32 %v322, %v320
    %v330 = vmul.f32 %v322, %v321
    %v331 = vadd.f32 %v306, %v323
    %v332 = vadd.f32 %v307, %v324
    %v333 = vadd.f32 %v308, %v325
    %v334 = vadd.f32 %v309, %v326
    %v335 = vadd.f32 %v310, %v327
    %v336 = vadd.f32 %v311, %v328
    %v337 = vadd.f32 %v312, %v329
    %v338 = vadd.f32 %v313, %v330
    %s339 = sld [smem:[#allocation2 + $0xc]]
    %s340 = sld [smem:[#allocation2 + $0xd]]
    %s341 = sld [smem:[#allocation2 + $0xe]]
    %s342 = sld [smem:[#allocation2 + $0xf]]
    %s343 = sld [smem:[#allocation2 + $0x10]]
    %s344 = sld [smem:[#allocation2 + $0x11]]
    %s345 = sld [smem:[#allocation2 + $0x12]]
    %s346 = sld [smem:[#allocation2 + $0x13]]
    %s347 = sadd.f32 %s339, %s343
    %s348 = sadd.f32 %s340, %s344
    %s349 = sadd.f32 %s341, %s345
    %s350 = sadd.f32 %s342, %s346
    %s351 = sld [smem:[#allocation2 + $0x14]]
    %s352 = sld [smem:[#allocation2 + $0x15]]
    %s353 = sld [smem:[#allocation2 + $0x16]]
    %s354 = sld [smem:[#allocation2 + $0x17]]
    %v355 = vstv %s350
    %v356 = vmul.f32 %v355, %v164
    %v357 = vmul.f32 %v355, %v166
    %v358 = vmul.f32 %v355, %v241
    %v359 = vmul.f32 %v355, %v243
    %v360 = vmul.f32 %v355, %v170
    %v361 = vmul.f32 %v355, %v172
    %v362 = vmul.f32 %v355, %v247
    %v363 = vmul.f32 %v355, %v249
    %v364 = vstv %s347
    %v365 = vadd.f32 %v364, %v356
    %v366 = vadd.f32 %v364, %v357
    %v367 = vadd.f32 %v364, %v358
    %v368 = vadd.f32 %v364, %v359
    %v369 = vadd.f32 %v364, %v360
    %v370 = vadd.f32 %v364, %v361
    %v371 = vadd.f32 %v364, %v362
    %v372 = vadd.f32 %v364, %v363
    %v373 = vmul.f32 %v164, %v365
    %v374 = vmul.f32 %v166, %v366
    %v375 = vmul.f32 %v241, %v367
    %v376 = vmul.f32 %v243, %v368
    %v377 = vmul.f32 %v170, %v369
    %v378 = vmul.f32 %v172, %v370
    %v379 = vmul.f32 %v247, %v371
    %v380 = vmul.f32 %v249, %v372
    %v381 = vstv %s348
    %v382 = vmul.f32 %v381, %v289
    %v383 = vmul.f32 %v381, %v290
    %v384 = vmul.f32 %v381, %v291
    %v385 = vmul.f32 %v381, %v292
    %v386 = vmul.f32 %v381, %v293
    %v387 = vmul.f32 %v381, %v294
    %v388 = vmul.f32 %v381, %v295
    %v389 = vmul.f32 %v381, %v296
    %v390 = vadd.f32 %v373, %v382
    %v391 = vadd.f32 %v374, %v383
    %v392 = vadd.f32 %v375, %v384
    %v393 = vadd.f32 %v376, %v385
    %v394 = vadd.f32 %v377, %v386
    %v395 = vadd.f32 %v378, %v387
    %v396 = vadd.f32 %v379, %v388
    %v397 = vadd.f32 %v380, %v389
    %v398 = vstv %s349
    %v399 = vmul.f32 %v398, %v314
    %v400 = vmul.f32 %v398, %v315
    %v401 = vmul.f32 %v398, %v316
    %v402 = vmul.f32 %v398, %v317
    %v403 = vmul.f32 %v398, %v318
    %v404 = vmul.f32 %v398, %v319
    %v405 = vmul.f32 %v398, %v320
    %v406 = vmul.f32 %v398, %v321
    %v407 = vadd.f32 %v390, %v399
    %v408 = vadd.f32 %v391, %v400
    %v409 = vadd.f32 %v392, %v401
    %v410 = vadd.f32 %v393, %v402
    %v411 = vadd.f32 %v394, %v403
    %v412 = vadd.f32 %v395, %v404
    %v413 = vadd.f32 %v396, %v405
    %v414 = vadd.f32 %v397, %v406
    %v415 = vstv %s354
    %v416 = vmul.f32 %v415, %v331
    %v417 = vmul.f32 %v415, %v332
    %v418 = vmul.f32 %v415, %v333
    %v419 = vmul.f32 %v415, %v334
    %v420 = vmul.f32 %v415, %v335
    %v421 = vmul.f32 %v415, %v336
    %v422 = vmul.f32 %v415, %v337
    %v423 = vmul.f32 %v415, %v338
    %v424 = vstv %s351
    %v425 = vadd.f32 %v424, %v416
    %v426 = vadd.f32 %v424, %v417
    %v427 = vadd.f32 %v424, %v418
    %v428 = vadd.f32 %v424, %v419
    %v429 = vadd.f32 %v424, %v420
    %v430 = vadd.f32 %v424, %v421
    %v431 = vadd.f32 %v424, %v422
    %v432 = vadd.f32 %v424, %v423
    %v433 = vmul.f32 %v331, %v425
    %v434 = vmul.f32 %v332, %v426
    %v435 = vmul.f32 %v333, %v427
    %v436 = vmul.f32 %v334, %v428
    %v437 = vmul.f32 %v335, %v429
    %v438 = vmul.f32 %v336, %v430
    %v439 = vmul.f32 %v337, %v431
    %v440 = vmul.f32 %v338, %v432
    %v441 = vmax.f32 %v331, 0.0
    %v442 = vmax.f32 %v332, 0.0
    %v443 = vmax.f32 %v333, 0.0
    %v444 = vmax.f32 %v334, 0.0
    %v445 = vmax.f32 %v335, 0.0
    %v446 = vmax.f32 %v336, 0.0
    %v447 = vmax.f32 %v337, 0.0
    %v448 = vmax.f32 %v338, 0.0
    %v449 = vstv %s352
    %v450 = vmul.f32 %v449, %v441
    %v451 = vmul.f32 %v449, %v442
    %v452 = vmul.f32 %v449, %v443
    %v453 = vmul.f32 %v449, %v444
    %v454 = vmul.f32 %v449, %v445
    %v455 = vmul.f32 %v449, %v446
    %v456 = vmul.f32 %v449, %v447
    %v457 = vmul.f32 %v449, %v448
    %v458 = vadd.f32 %v433, %v450
    %v459 = vadd.f32 %v434, %v451
    %v460 = vadd.f32 %v435, %v452
    %v461 = vadd.f32 %v436, %v453
    %v462 = vadd.f32 %v437, %v454
    %v463 = vadd.f32 %v438, %v455
    %v464 = vadd.f32 %v439, %v456
    %v465 = vadd.f32 %v440, %v457
    %v466 = vtanh.pop %v331
    %v467 = vtanh.pop %v332
    %v468 = vtanh.pop %v333
    %v469 = vtanh.pop %v334
    %v470 = vtanh.pop %v335
    %v471 = vtanh.pop %v336
    %v472 = vtanh.pop %v337
    %v473 = vtanh.pop %v338
    %v474 = vstv %s353
    %v475 = vmul.f32 %v474, %v466
    %v476 = vmul.f32 %v474, %v467
    %v477 = vmul.f32 %v474, %v468
    %v478 = vmul.f32 %v474, %v469
    %v479 = vmul.f32 %v474, %v470
    %v480 = vmul.f32 %v474, %v471
    %v481 = vmul.f32 %v474, %v472
    %v482 = vmul.f32 %v474, %v473
    %v483 = vadd.f32 %v458, %v475
    %v484 = vadd.f32 %v459, %v476
    %v485 = vadd.f32 %v460, %v477
    %v486 = vadd.f32 %v461, %v478
    %v487 = vadd.f32 %v462, %v479
    %v488 = vadd.f32 %v463, %v480
    %v489 = vadd.f32 %v464, %v481
    %v490 = vadd.f32 %v465, %v482
    %v491 = vadd.f32 %v407, %v483
    %v492 = vadd.f32 %v408, %v484
    %v493 = vadd.f32 %v409, %v485
    %v494 = vadd.f32 %v410, %v486
    %v495 = vadd.f32 %v411, %v487
    %v496 = vadd.f32 %v412, %v488
    %v497 = vadd.f32 %v413, %v489
    %v498 = vadd.f32 %v414, %v490
    %v499 = vld [vmem:[%s4] sm:$0xf]
    %v500 = vld [vmem:[%s4 + $0x4] sm:$0xf]
    %v501 = vld [vmem:[%s4 + $0x8] sm:$0xf]
    %v502 = vld [vmem:[%s4 + $0xc] sm:$0xf]
    %v503 = vld [vmem:[%s4 + $0x10] sm:$0xf]
    %v504 = vld [vmem:[%s4 + $0x14] sm:$0xf]
    %v505 = vld [vmem:[%s4 + $0x18] sm:$0xf]
    %v506 = vld [vmem:[%s4 + $0x1c] sm:$0xf]
    %v507 = vld [vmem:[%s4 + $0x20] sm:$0xf]
    %v508 = vld [vmem:[%s4 + $0x24] sm:$0xf]
    %v509 = vld [vmem:[%s4 + $0x28] sm:$0xf]
    %v510 = vld [vmem:[%s4 + $0x2c] sm:$0xf]
    %v511 = vld [vmem:[%s4 + $0x30] sm:$0xf]
    %v512 = vld [vmem:[%s4 + $0x34] sm:$0xf]
    %v513 = vld [vmem:[%s4 + $0x38] sm:$0xf]
    %v514 = vld [vmem:[%s4 + $0x3c] sm:$0xf]
    %v515 = vld [vmem:[%s4 + $0x40] sm:$0xf]
    %v516 = vld [vmem:[%s4 + $0x44] sm:$0xf]
    %v517 = vld [vmem:[%s4 + $0x48] sm:$0xf]
    %v518 = vld [vmem:[%s4 + $0x4c] sm:$0xf]
    %v519 = vld [vmem:[%s4 + $0x50] sm:$0xf]
    %v520 = vld [vmem:[%s4 + $0x54] sm:$0xf]
    %v521 = vld [vmem:[%s4 + $0x58] sm:$0xf]
    %v522 = vld [vmem:[%s4 + $0x5c] sm:$0xf]
    %v523 = vld [vmem:[%s4 + $0x60] sm:$0xf]
    %v524 = vld [vmem:[%s4 + $0x64] sm:$0xf]
    %v525 = vld [vmem:[%s4 + $0x68] sm:$0xf]
    %v526 = vld [vmem:[%s4 + $0x6c] sm:$0xf]
    %v527 = vld [vmem:[%s4 + $0x70] sm:$0xf]
    %v528 = vld [vmem:[%s4 + $0x74] sm:$0xf]
    %v529 = vld [vmem:[%s4 + $0x78] sm:$0xf]
    %v530 = vld [vmem:[%s4 + $0x7c] sm:$0xf]
    %v531 = vld [vmem:[%s4 + $0x80] sm:$0xf]
    %v532 = vld [vmem:[%s4 + $0x84] sm:$0xf]
    %v533 = vld [vmem:[%s4 + $0x88] sm:$0xf]
    %v534 = vld [vmem:[%s4 + $0x8c] sm:$0xf]
    %v535 = vld [vmem:[%s4 + $0x90] sm:$0xf]
    %v536 = vld [vmem:[%s4 + $0x94] sm:$0xf]
    %v537 = vld [vmem:[%s4 + $0x98] sm:$0xf]
    %v538 = vld [vmem:[%s4 + $0x9c] sm:$0xf]
    %v539 = vld [vmem:[%s4 + $0xa0] sm:$0xf]
    %v540 = vld [vmem:[%s4 + $0xa4] sm:$0xf]
    %v541 = vld [vmem:[%s4 + $0xa8] sm:$0xf]
    %v542 = vld [vmem:[%s4 + $0xac] sm:$0xf]
    %v543 = vld [vmem:[%s4 + $0xb0] sm:$0xf]
    %v544 = vld [vmem:[%s4 + $0xb4] sm:$0xf]
    %v545 = vld [vmem:[%s4 + $0xb8] sm:$0xf]
    %v546 = vld [vmem:[%s4 + $0xbc] sm:$0xf]
    %v547 = vld [vmem:[%s4 + $0xc0] sm:$0xf]
    %v548 = vld [vmem:[%s4 + $0xc4] sm:$0xf]
    %v549 = vld [vmem:[%s4 + $0xc8] sm:$0xf]
    %v550 = vld [vmem:[%s4 + $0xcc] sm:$0xf]
    %v551 = vld [vmem:[%s4 + $0xd0] sm:$0xf]
    %v552 = vld [vmem:[%s4 + $0xd4] sm:$0xf]
    %v553 = vld [vmem:[%s4 + $0xd8] sm:$0xf]
    %v554 = vld [vmem:[%s4 + $0xdc] sm:$0xf]
    %v555 = vld [vmem:[%s4 + $0xe0] sm:$0xf]
    %v556 = vld [vmem:[%s4 + $0xe4] sm:$0xf]
    %v557 = vld [vmem:[%s4 + $0xe8] sm:$0xf]
    %v558 = vld [vmem:[%s4 + $0xec] sm:$0xf]
    %v559 = vld [vmem:[%s4 + $0xf0] sm:$0xf]
    %v560 = vld [vmem:[%s4 + $0xf4] sm:$0xf]
    %v561 = vld [vmem:[%s4 + $0xf8] sm:$0xf]
    %v562 = vld [vmem:[%s4 + $0xfc] sm:$0xf]
    %v563 = vunpack.c.l.bf16 %v499
    %v564 = vunpack.c.l.bf16 %v500
    %v565 = vunpack.c.l.bf16 %v501
    %v566 = vunpack.c.l.bf16 %v502
    %v567 = vunpack.c.l.bf16 %v503
    %v568 = vunpack.c.l.bf16 %v504
    %v569 = vunpack.c.l.bf16 %v505
    %v570 = vunpack.c.l.bf16 %v506
    %v571 = vunpack.c.l.bf16 %v507
    %v572 = vunpack.c.l.bf16 %v508
    %v573 = vunpack.c.l.bf16 %v509
    %v574 = vunpack.c.l.bf16 %v510
    %v575 = vunpack.c.l.bf16 %v511
    %v576 = vunpack.c.l.bf16 %v512
    %v577 = vunpack.c.l.bf16 %v513
    %v578 = vunpack.c.l.bf16 %v514
    %v579 = vunpack.c.l.bf16 %v515
    %v580 = vunpack.c.l.bf16 %v516
    %v581 = vunpack.c.l.bf16 %v517
    %v582 = vunpack.c.l.bf16 %v518
    %v583 = vunpack.c.l.bf16 %v519
    %v584 = vunpack.c.l.bf16 %v520
    %v585 = vunpack.c.l.bf16 %v521
    %v586 = vunpack.c.l.bf16 %v522
    %v587 = vunpack.c.l.bf16 %v523
    %v588 = vunpack.c.l.bf16 %v524
    %v589 = vunpack.c.l.bf16 %v525
    %v590 = vunpack.c.l.bf16 %v526
    %v591 = vunpack.c.l.bf16 %v527
    %v592 = vunpack.c.l.bf16 %v528
    %v593 = vunpack.c.l.bf16 %v529
    %v594 = vunpack.c.l.bf16 %v530
    %v595 = vunpack.c.l.bf16 %v531
    %v596 = vunpack.c.l.bf16 %v532
    %v597 = vunpack.c.l.bf16 %v533
    %v598 = vunpack.c.l.bf16 %v534
    %v599 = vunpack.c.l.bf16 %v535
    %v600 = vunpack.c.l.bf16 %v536
    %v601 = vunpack.c.l.bf16 %v537
    %v602 = vunpack.c.l.bf16 %v538
    %v603 = vunpack.c.l.bf16 %v539
    %v604 = vunpack.c.l.bf16 %v540
    %v605 = vunpack.c.l.bf16 %v541
    %v606 = vunpack.c.l.bf16 %v542
    %v607 = vunpack.c.l.bf16 %v543
    %v608 = vunpack.c.l.bf16 %v544
    %v609 = vunpack.c.l.bf16 %v545
    %v610 = vunpack.c.l.bf16 %v546
    %v611 = vunpack.c.l.bf16 %v547
    %v612 = vunpack.c.l.bf16 %v548
    %v613 = vunpack.c.l.bf16 %v549
    %v614 = vunpack.c.l.bf16 %v550
    %v615 = vunpack.c.l.bf16 %v551
    %v616 = vunpack.c.l.bf16 %v552
    %v617 = vunpack.c.l.bf16 %v553
    %v618 = vunpack.c.l.bf16 %v554
    %v619 = vunpack.c.l.bf16 %v555
    %v620 = vunpack.c.l.bf16 %v556
    %v621 = vunpack.c.l.bf16 %v557
    %v622 = vunpack.c.l.bf16 %v558
    %v623 = vunpack.c.l.bf16 %v559
    %v624 = vunpack.c.l.bf16 %v560
    %v625 = vunpack.c.l.bf16 %v561
    %v626 = vunpack.c.l.bf16 %v562
    %627 = vmatprep.subr.mxu0 0.0
    %628 = vmatpush1.msra.mxu0 %v578
    %629 = vmatprep.subr.mxu0 0.0
    %630 = vmatpush1.msra.mxu0 %v577
    %631 = vmatprep.subr.mxu0 0.0
    %632 = vmatpush1.msra.mxu0 %v576
    %633 = vmatprep.subr.mxu0 0.0
    %634 = vmatpush1.msra.mxu0 %v575
    %635 = vmatprep.subr.mxu0 0.0
    %636 = vmatpush1.msra.mxu0 %v574
    %637 = vmatprep.subr.mxu0 0.0
    %638 = vmatpush1.msra.mxu0 %v573
    %639 = vmatprep.subr.mxu0 0.0
    %640 = vmatpush1.msra.mxu0 %v572
    %641 = vmatprep.subr.mxu0 0.0
    %642 = vmatpush1.msra.mxu0 %v571
    %643 = vmatprep.subr.mxu0 0.0
    %644 = vmatpush1.msra.mxu0 %v570
    %645 = vmatprep.subr.mxu0 0.0
    %646 = vmatpush1.msra.mxu0 %v569
    %647 = vmatprep.subr.mxu0 0.0
    %648 = vmatpush1.msra.mxu0 %v568
    %649 = vmatprep.subr.mxu0 0.0
    %650 = vmatpush1.msra.mxu0 %v567
    %651 = vmatprep.subr.mxu0 0.0
    %652 = vmatpush1.msra.mxu0 %v566
    %653 = vmatprep.subr.mxu0 0.0
    %654 = vmatpush1.msra.mxu0 %v565
    %655 = vmatprep.subr.mxu0 0.0
    %656 = vmatpush1.msra.mxu0 %v564
    %657 = vmatprep.subr.mxu0 0.0
    %658 = vmatpush1.msra.mxu0 %v563
    %659 = vmatprep.subr.mxu0 0.0
    %660 = vmatpush2.msra.mxu0 %v594
    %661 = vmatprep.subr.mxu0 0.0
    %662 = vmatpush2.msra.mxu0 %v593
    %663 = vmatprep.subr.mxu0 0.0
    %664 = vmatpush2.msra.mxu0 %v592
    %665 = vmatprep.subr.mxu0 0.0
    %666 = vmatpush2.msra.mxu0 %v591
    %667 = vmatprep.subr.mxu0 0.0
    %668 = vmatpush2.msra.mxu0 %v590
    %669 = vmatprep.subr.mxu0 0.0
    %670 = vmatpush2.msra.mxu0 %v589
    %671 = vmatprep.subr.mxu0 0.0
    %672 = vmatpush2.msra.mxu0 %v588
    %673 = vmatprep.subr.mxu0 0.0
    %674 = vmatpush2.msra.mxu0 %v587
    %675 = vmatprep.subr.mxu0 0.0
    %676 = vmatpush2.msra.mxu0 %v586
    %677 = vmatprep.subr.mxu0 0.0
    %678 = vmatpush2.msra.mxu0 %v585
    %679 = vmatprep.subr.mxu0 0.0
    %680 = vmatpush2.msra.mxu0 %v584
    %681 = vmatprep.subr.mxu0 0.0
    %682 = vmatpush2.msra.mxu0 %v583
    %683 = vmatprep.subr.mxu0 0.0
    %684 = vmatpush2.msra.mxu0 %v582
    %685 = vmatprep.subr.mxu0 0.0
    %686 = vmatpush2.msra.mxu0 %v581
    %687 = vmatprep.subr.mxu0 0.0
    %688 = vmatpush2.msra.mxu0 %v580
    %689 = vmatprep.subr.mxu0 0.0
    %690 = vmatpush2.msra.mxu0 %v579
    %691 = vmatprep.mubr.f32.mxu0 %v332
    %692 = vmatmul.mubr.f32.gmra.mxu0 %v331
    %v693 = vpop.f32.mrf.mxu0
    %v694 = vadd.f32 0.0, %v693
    %v695 = vpop.f32.mrf.mxu0
    %696 = vmatprep.mubr.f32.mxu0 %v336
    %697 = vmatmul.mubr.f32.gmra.mxu0 %v335
    %v698 = vpop.f32.mrf.mxu0
    %v699 = vadd.f32 0.0, %v698
    %v700 = vpop.f32.mrf.mxu0
    %701 = vdwg.mxu0
    %702 = vmatprep.subr.mxu0 0.0
    %703 = vmatpush1.msra.mxu0 %v610
    %704 = vmatprep.subr.mxu0 0.0
    %705 = vmatpush1.msra.mxu0 %v609
    %706 = vmatprep.subr.mxu0 0.0
    %707 = vmatpush1.msra.mxu0 %v608
    %708 = vmatprep.subr.mxu0 0.0
    %709 = vmatpush1.msra.mxu0 %v607
    %710 = vmatprep.subr.mxu0 0.0
    %711 = vmatpush1.msra.mxu0 %v606
    %712 = vmatprep.subr.mxu0 0.0
    %713 = vmatpush1.msra.mxu0 %v605
    %714 = vmatprep.subr.mxu0 0.0
    %715 = vmatpush1.msra.mxu0 %v604
    %716 = vmatprep.subr.mxu0 0.0
    %717 = vmatpush1.msra.mxu0 %v603
    %718 = vmatprep.subr.mxu0 0.0
    %719 = vmatpush1.msra.mxu0 %v602
    %720 = vmatprep.subr.mxu0 0.0
    %721 = vmatpush1.msra.mxu0 %v601
    %722 = vmatprep.subr.mxu0 0.0
    %723 = vmatpush1.msra.mxu0 %v600
    %724 = vmatprep.subr.mxu0 0.0
    %725 = vmatpush1.msra.mxu0 %v599
    %726 = vmatprep.subr.mxu0 0.0
    %727 = vmatpush1.msra.mxu0 %v598
    %728 = vmatprep.subr.mxu0 0.0
    %729 = vmatpush1.msra.mxu0 %v597
    %730 = vmatprep.subr.mxu0 0.0
    %731 = vmatpush1.msra.mxu0 %v596
    %732 = vmatprep.subr.mxu0 0.0
    %733 = vmatpush1.msra.mxu0 %v595
    %734 = vmatprep.subr.mxu0 0.0
    %735 = vmatpush2.msra.mxu0 %v626
    %736 = vmatprep.subr.mxu0 0.0
    %737 = vmatpush2.msra.mxu0 %v625
    %738 = vmatprep.subr.mxu0 0.0
    %739 = vmatpush2.msra.mxu0 %v624
    %740 = vmatprep.subr.mxu0 0.0
    %741 = vmatpush2.msra.mxu0 %v623
    %742 = vmatprep.subr.mxu0 0.0
    %743 = vmatpush2.msra.mxu0 %v622
    %744 = vmatprep.subr.mxu0 0.0
    %745 = vmatpush2.msra.mxu0 %v621
    %746 = vmatprep.subr.mxu0 0.0
    %747 = vmatpush2.msra.mxu0 %v620
    %748 = vmatprep.subr.mxu0 0.0
    %749 = vmatpush2.msra.mxu0 %v619
    %750 = vmatprep.subr.mxu0 0.0
    %751 = vmatpush2.msra.mxu0 %v618
    %752 = vmatprep.subr.mxu0 0.0
    %753 = vmatpush2.msra.mxu0 %v617
    %754 = vmatprep.subr.mxu0 0.0
    %755 = vmatpush2.msra.mxu0 %v616
    %756 = vmatprep.subr.mxu0 0.0
    %757 = vmatpush2.msra.mxu0 %v615
    %758 = vmatprep.subr.mxu0 0.0
    %759 = vmatpush2.msra.mxu0 %v614
    %760 = vmatprep.subr.mxu0 0.0
    %761 = vmatpush2.msra.mxu0 %v613
    %762 = vmatprep.subr.mxu0 0.0
    %763 = vmatpush2.msra.mxu0 %v612
    %764 = vmatprep.subr.mxu0 0.0
    %765 = vmatpush2.msra.mxu0 %v611
    %766 = vmatprep.mubr.f32.mxu0 %v334
    %767 = vmatmul.mubr.f32.gmra.mxu0 %v333
    %v768 = vpop.f32.mrf.mxu0
    %v769 = vadd.f32 %v694, %v768
    %v770 = vpop.f32.mrf.mxu0
    %771 = vmatprep.mubr.f32.mxu0 %v338
    %772 = vmatmul.mubr.f32.gmra.mxu0 %v337
    %v773 = vpop.f32.mrf.mxu0
    %v774 = vadd.f32 %v699, %v773
    %v775 = vpop.f32.mrf.mxu0
    %776 = vdwg.mxu0
    %777 = vmatprep.subr.mxu0 0.0
    %778 = vmatpush1.msra.mxu0 %v578
    %779 = vmatprep.subr.mxu0 0.0
    %780 = vmatpush1.msra.mxu0 %v577
    %781 = vmatprep.subr.mxu0 0.0
    %782 = vmatpush1.msra.mxu0 %v576
    %783 = vmatprep.subr.mxu0 0.0
    %784 = vmatpush1.msra.mxu0 %v575
    %785 = vmatprep.subr.mxu0 0.0
    %786 = vmatpush1.msra.mxu0 %v574
    %787 = vmatprep.subr.mxu0 0.0
    %788 = vmatpush1.msra.mxu0 %v573
    %789 = vmatprep.subr.mxu0 0.0
    %790 = vmatpush1.msra.mxu0 %v572
    %791 = vmatprep.subr.mxu0 0.0
    %792 = vmatpush1.msra.mxu0 %v571
    %793 = vmatprep.subr.mxu0 0.0
    %794 = vmatpush1.msra.mxu0 %v570
    %795 = vmatprep.subr.mxu0 0.0
    %796 = vmatpush1.msra.mxu0 %v569
    %797 = vmatprep.subr.mxu0 0.0
    %798 = vmatpush1.msra.mxu0 %v568
    %799 = vmatprep.subr.mxu0 0.0
    %800 = vmatpush1.msra.mxu0 %v567
    %801 = vmatprep.subr.mxu0 0.0
    %802 = vmatpush1.msra.mxu0 %v566
    %803 = vmatprep.subr.mxu0 0.0
    %804 = vmatpush1.msra.mxu0 %v565
    %805 = vmatprep.subr.mxu0 0.0
    %806 = vmatpush1.msra.mxu0 %v564
    %807 = vmatprep.subr.mxu0 0.0
    %808 = vmatpush1.msra.mxu0 %v563
    %809 = vmatprep.subr.mxu0 0.0
    %810 = vmatpush2.msra.mxu0 %v594
    %811 = vmatprep.subr.mxu0 0.0
    %812 = vmatpush2.msra.mxu0 %v593
    %813 = vmatprep.subr.mxu0 0.0
    %814 = vmatpush2.msra.mxu0 %v592
    %815 = vmatprep.subr.mxu0 0.0
    %816 = vmatpush2.msra.mxu0 %v591
    %817 = vmatprep.subr.mxu0 0.0
    %818 = vmatpush2.msra.mxu0 %v590
    %819 = vmatprep.subr.mxu0 0.0
    %820 = vmatpush2.msra.mxu0 %v589
    %821 = vmatprep.subr.mxu0 0.0
    %822 = vmatpush2.msra.mxu0 %v588
    %823 = vmatprep.subr.mxu0 0.0
    %824 = vmatpush2.msra.mxu0 %v587
    %825 = vmatprep.subr.mxu0 0.0
    %826 = vmatpush2.msra.mxu0 %v586
    %827 = vmatprep.subr.mxu0 0.0
    %828 = vmatpush2.msra.mxu0 %v585
    %829 = vmatprep.subr.mxu0 0.0
    %830 = vmatpush2.msra.mxu0 %v584
    %831 = vmatprep.subr.mxu0 0.0
    %832 = vmatpush2.msra.mxu0 %v583
    %833 = vmatprep.subr.mxu0 0.0
    %834 = vmatpush2.msra.mxu0 %v582
    %835 = vmatprep.subr.mxu0 0.0
    %836 = vmatpush2.msra.mxu0 %v581
    %837 = vmatprep.subr.mxu0 0.0
    %838 = vmatpush2.msra.mxu0 %v580
    %839 = vmatprep.subr.mxu0 0.0
    %840 = vmatpush2.msra.mxu0 %v579
    %841 = vmatprep.mubr.f32.mxu0 %v492
    %842 = vmatmul.mubr.f32.gmra.mxu0 %v491
    %v843 = vpop.f32.mrf.mxu0
    %v844 = vadd.f32 0.0, %v843
    %v845 = vpop.f32.mrf.mxu0
    %846 = vmatprep.mubr.f32.mxu0 %v496
    %847 = vmatmul.mubr.f32.gmra.mxu0 %v495
    %v848 = vpop.f32.mrf.mxu0
    %v849 = vadd.f32 0.0, %v848
    %v850 = vpop.f32.mrf.mxu0
    %851 = vdwg.mxu0
    %852 = vmatprep.subr.mxu0 0.0
    %853 = vmatpush1.msra.mxu0 %v610
    %854 = vmatprep.subr.mxu0 0.0
    %855 = vmatpush1.msra.mxu0 %v609
    %856 = vmatprep.subr.mxu0 0.0
    %857 = vmatpush1.msra.mxu0 %v608
    %858 = vmatprep.subr.mxu0 0.0
    %859 = vmatpush1.msra.mxu0 %v607
    %860 = vmatprep.subr.mxu0 0.0
    %861 = vmatpush1.msra.mxu0 %v606
    %862 = vmatprep.subr.mxu0 0.0
    %863 = vmatpush1.msra.mxu0 %v605
    %864 = vmatprep.subr.mxu0 0.0
    %865 = vmatpush1.msra.mxu0 %v604
    %866 = vmatprep.subr.mxu0 0.0
    %867 = vmatpush1.msra.mxu0 %v603
    %868 = vmatprep.subr.mxu0 0.0
    %869 = vmatpush1.msra.mxu0 %v602
    %870 = vmatprep.subr.mxu0 0.0
    %871 = vmatpush1.msra.mxu0 %v601
    %872 = vmatprep.subr.mxu0 0.0
    %873 = vmatpush1.msra.mxu0 %v600
    %874 = vmatprep.subr.mxu0 0.0
    %875 = vmatpush1.msra.mxu0 %v599
    %876 = vmatprep.subr.mxu0 0.0
    %877 = vmatpush1.msra.mxu0 %v598
    %878 = vmatprep.subr.mxu0 0.0
    %879 = vmatpush1.msra.mxu0 %v597
    %880 = vmatprep.subr.mxu0 0.0
    %881 = vmatpush1.msra.mxu0 %v596
    %882 = vmatprep.subr.mxu0 0.0
    %883 = vmatpush1.msra.mxu0 %v595
    %884 = vmatprep.subr.mxu0 0.0
    %885 = vmatpush2.msra.mxu0 %v626
    %886 = vmatprep.subr.mxu0 0.0
    %887 = vmatpush2.msra.mxu0 %v625
    %888 = vmatprep.subr.mxu0 0.0
    %889 = vmatpush2.msra.mxu0 %v624
    %890 = vmatprep.subr.mxu0 0.0
    %891 = vmatpush2.msra.mxu0 %v623
    %892 = vmatprep.subr.mxu0 0.0
    %893 = vmatpush2.msra.mxu0 %v622
    %894 = vmatprep.subr.mxu0 0.0
    %895 = vmatpush2.msra.mxu0 %v621
    %896 = vmatprep.subr.mxu0 0.0
    %897 = vmatpush2.msra.mxu0 %v620
    %898 = vmatprep.subr.mxu0 0.0
    %899 = vmatpush2.msra.mxu0 %v619
    %900 = vmatprep.subr.mxu0 0.0
    %901 = vmatpush2.msra.mxu0 %v618
    %902 = vmatprep.subr.mxu0 0.0
    %903 = vmatpush2.msra.mxu0 %v617
    %904 = vmatprep.subr.mxu0 0.0
    %905 = vmatpush2.msra.mxu0 %v616
    %906 = vmatprep.subr.mxu0 0.0
    %907 = vmatpush2.msra.mxu0 %v615
    %908 = vmatprep.subr.mxu0 0.0
    %909 = vmatpush2.msra.mxu0 %v614
    %910 = vmatprep.subr.mxu0 0.0
    %911 = vmatpush2.msra.mxu0 %v613
    %912 = vmatprep.subr.mxu0 0.0
    %913 = vmatpush2.msra.mxu0 %v612
    %914 = vmatprep.subr.mxu0 0.0
    %915 = vmatpush2.msra.mxu0 %v611
    %916 = vmatprep.mubr.f32.mxu0 %v494
    %917 = vmatmul.mubr.f32.gmra.mxu0 %v493
    %v918 = vpop.f32.mrf.mxu0
    %v919 = vadd.f32 %v844, %v918
    %v920 = vpop.f32.mrf.mxu0
    %921 = vmatprep.mubr.f32.mxu0 %v498
    %922 = vmatmul.mubr.f32.gmra.mxu0 %v497
    %v923 = vpop.f32.mrf.mxu0
    %v924 = vadd.f32 %v849, %v923
    %v925 = vpop.f32.mrf.mxu0
    %926 = vdwg.mxu0
    %v927 = vld [vmem:[%s5] sm:$0xff]
    %v928 = vld [vmem:[%s5 + $0x8] sm:$0xff]
    %v929 = vld [vmem:[%s5 + $0x10] sm:$0xff]
    %v930 = vld [vmem:[%s5 + $0x18] sm:$0xff]
    %v931 = vld [vmem:[%s6] sm:$0xff]
    %v932 = vld [vmem:[%s6 + $0x8] sm:$0xff]
    %v933 = vld [vmem:[%s6 + $0x10] sm:$0xff]
    %v934 = vld [vmem:[%s6 + $0x18] sm:$0xff]
    %vm935 = vcmask 130048
    %v937 = vsel %vm935, %v931, 0
    %v940 = vsel %vm935, %v932, 0
    %v943 = vsel %vm935, %v933, 0
    %v946 = vsel %vm935, %v934, 0
    %948 = vmatprep.subr.mxu0 0.0
    %949 = vmatpush1.msra.mxu0 0.0
    %950 = vmatprep.subr.mxu0 0.0
    %951 = vmatpush1.msra.mxu0 0.0
    %952 = vmatprep.subr.mxu0 0.0
    %953 = vmatpush1.msra.mxu0 0.0
    %954 = vmatprep.subr.mxu0 0.0
    %955 = vmatpush1.msra.mxu0 0.0
    %956 = vmatprep.subr.mxu0 0.0
    %957 = vmatpush1.msra.mxu0 0.0
    %958 = vmatprep.subr.mxu0 0.0
    %959 = vmatpush1.msra.mxu0 0.0
    %960 = vmatprep.subr.mxu0 0.0
    %961 = vmatpush1.msra.mxu0 0.0
    %962 = vmatprep.subr.mxu0 0.0
    %963 = vmatpush1.msra.mxu0 0.0
    %964 = vmatprep.subr.mxu0 0.0
    %965 = vmatpush1.msra.mxu0 0.0
    %966 = vmatprep.subr.mxu0 0.0
    %967 = vmatpush1.msra.mxu0 0.0
    %968 = vmatprep.subr.mxu0 0.0
    %969 = vmatpush1.msra.mxu0 0.0
    %970 = vmatprep.subr.mxu0 0.0
    %971 = vmatpush1.msra.mxu0 0.0
    %972 = vmatprep.subr.mxu0 0.0
    %973 = vmatpush1.msra.mxu0 0.0
    %974 = vmatprep.subr.mxu0 0.0
    %975 = vmatpush1.msra.mxu0 0.0
    %976 = vmatprep.subr.mxu0 0.0
    %977 = vmatpush1.msra.mxu0 %v924
    %978 = vmatprep.subr.mxu0 0.0
    %979 = vmatpush1.msra.mxu0 %v919
    %980 = vmatprep.subr.mxu0 0.0
    %981 = vmatpush2.msra.mxu0 0.0
    %982 = vmatprep.subr.mxu0 0.0
    %983 = vmatpush2.msra.mxu0 0.0
    %984 = vmatprep.subr.mxu0 0.0
    %985 = vmatpush2.msra.mxu0 0.0
    %986 = vmatprep.subr.mxu0 0.0
    %987 = vmatpush2.msra.mxu0 0.0
    %988 = vmatprep.subr.mxu0 0.0
    %989 = vmatpush2.msra.mxu0 0.0
    %990 = vmatprep.subr.mxu0 0.0
    %991 = vmatpush2.msra.mxu0 0.0
    %992 = vmatprep.subr.mxu0 0.0
    %993 = vmatpush2.msra.mxu0 0.0
    %994 = vmatprep.subr.mxu0 0.0
    %995 = vmatpush2.msra.mxu0 0.0
    %996 = vmatprep.subr.mxu0 0.0
    %997 = vmatpush2.msra.mxu0 0.0
    %998 = vmatprep.subr.mxu0 0.0
    %999 = vmatpush2.msra.mxu0 0.0
    %1000 = vmatprep.subr.mxu0 0.0
    %1001 = vmatpush2.msra.mxu0 0.0
    %1002 = vmatprep.subr.mxu0 0.0
    %1003 = vmatpush2.msra.mxu0 0.0
    %1004 = vmatprep.subr.mxu0 0.0
    %1005 = vmatpush2.msra.mxu0 0.0
    %1006 = vmatprep.subr.mxu0 0.0
    %1007 = vmatpush2.msra.mxu0 0.0
    %1008 = vmatprep.subr.mxu0 0.0
    %1009 = vmatpush2.msra.mxu0 0.0
    %1010 = vmatprep.subr.mxu0 0.0
    %1011 = vmatpush2.msra.mxu0 0.0
    %1012 = vmatprep.mubr.f32.mxu0 0.0
    %1013 = vmatmul.mubr.f32.gmra.mxu0 %v937
    %v1014 = vpop.f32.mrf.mxu0
    %v1015 = vadd.f32 0.0, %v1014
    %v1016 = vpop.f32.mrf.mxu0
    %1017 = vmatprep.mubr.f32.mxu0 0.0
    %1018 = vmatmul.mubr.f32.gmra.mxu0 %v940
    %v1019 = vpop.f32.mrf.mxu0
    %v1020 = vadd.f32 0.0, %v1019
    %v1021 = vpop.f32.mrf.mxu0
    %1022 = vmatprep.mubr.f32.mxu0 0.0
    %1023 = vmatmul.mubr.f32.gmra.mxu0 %v943
    %v1024 = vpop.f32.mrf.mxu0
    %v1025 = vadd.f32 0.0, %v1024
    %v1026 = vpop.f32.mrf.mxu0
    %1027 = vmatprep.mubr.f32.mxu0 0.0
    %1028 = vmatmul.mubr.f32.gmra.mxu0 %v946
    %v1029 = vpop.f32.mrf.mxu0
    %v1030 = vadd.f32 0.0, %v1029
    %v1031 = vpop.f32.mrf.mxu0
    %1032 = vdwg.mxu0
    %v1034 = vsel %vm935, %v927, 0
    %v1037 = vsel %vm935, %v928, 0
    %v1040 = vsel %vm935, %v929, 0
    %v1043 = vsel %vm935, %v930, 0
    %1045 = vmatprep.subr.mxu0 0.0
    %1046 = vmatpush1.msra.mxu0 0.0
    %1047 = vmatprep.subr.mxu0 0.0
    %1048 = vmatpush1.msra.mxu0 0.0
    %1049 = vmatprep.subr.mxu0 0.0
    %1050 = vmatpush1.msra.mxu0 0.0
    %1051 = vmatprep.subr.mxu0 0.0
    %1052 = vmatpush1.msra.mxu0 0.0
    %1053 = vmatprep.subr.mxu0 0.0
    %1054 = vmatpush1.msra.mxu0 0.0
    %1055 = vmatprep.subr.mxu0 0.0
    %1056 = vmatpush1.msra.mxu0 0.0
    %1057 = vmatprep.subr.mxu0 0.0
    %1058 = vmatpush1.msra.mxu0 0.0
    %1059 = vmatprep.subr.mxu0 0.0
    %1060 = vmatpush1.msra.mxu0 0.0
    %1061 = vmatprep.subr.mxu0 0.0
    %1062 = vmatpush1.msra.mxu0 0.0
    %1063 = vmatprep.subr.mxu0 0.0
    %1064 = vmatpush1.msra.mxu0 0.0
    %1065 = vmatprep.subr.mxu0 0.0
    %1066 = vmatpush1.msra.mxu0 0.0
    %1067 = vmatprep.subr.mxu0 0.0
    %1068 = vmatpush1.msra.mxu0 0.0
    %1069 = vmatprep.subr.mxu0 0.0
    %1070 = vmatpush1.msra.mxu0 0.0
    %1071 = vmatprep.subr.mxu0 0.0
    %1072 = vmatpush1.msra.mxu0 0.0
    %1073 = vmatprep.subr.mxu0 0.0
    %1074 = vmatpush1.msra.mxu0 %v774
    %1075 = vmatprep.subr.mxu0 0.0
    %1076 = vmatpush1.msra.mxu0 %v769
    %1077 = vmatprep.subr.mxu0 0.0
    %1078 = vmatpush2.msra.mxu0 0.0
    %1079 = vmatprep.subr.mxu0 0.0
    %1080 = vmatpush2.msra.mxu0 0.0
    %1081 = vmatprep.subr.mxu0 0.0
    %1082 = vmatpush2.msra.mxu0 0.0
    %1083 = vmatprep.subr.mxu0 0.0
    %1084 = vmatpush2.msra.mxu0 0.0
    %1085 = vmatprep.subr.mxu0 0.0
    %1086 = vmatpush2.msra.mxu0 0.0
    %1087 = vmatprep.subr.mxu0 0.0
    %1088 = vmatpush2.msra.mxu0 0.0
    %1089 = vmatprep.subr.mxu0 0.0
    %1090 = vmatpush2.msra.mxu0 0.0
    %1091 = vmatprep.subr.mxu0 0.0
    %1092 = vmatpush2.msra.mxu0 0.0
    %1093 = vmatprep.subr.mxu0 0.0
    %1094 = vmatpush2.msra.mxu0 0.0
    %1095 = vmatprep.subr.mxu0 0.0
    %1096 = vmatpush2.msra.mxu0 0.0
    %1097 = vmatprep.subr.mxu0 0.0
    %1098 = vmatpush2.msra.mxu0 0.0
    %1099 = vmatprep.subr.mxu0 0.0
    %1100 = vmatpush2.msra.mxu0 0.0
    %1101 = vmatprep.subr.mxu0 0.0
    %1102 = vmatpush2.msra.mxu0 0.0
    %1103 = vmatprep.subr.mxu0 0.0
    %1104 = vmatpush2.msra.mxu0 0.0
    %1105 = vmatprep.subr.mxu0 0.0
    %1106 = vmatpush2.msra.mxu0 0.0
    %1107 = vmatprep.subr.mxu0 0.0
    %1108 = vmatpush2.msra.mxu0 0.0
    %1109 = vmatprep.mubr.f32.mxu0 0.0
    %1110 = vmatmul.mubr.f32.gmra.mxu0 %v1034
    %v1111 = vpop.f32.mrf.mxu0
    %v1112 = vadd.f32 %v1015, %v1111
    %v1113 = vpop.f32.mrf.mxu0
    %1114 = vmatprep.mubr.f32.mxu0 0.0
    %1115 = vmatmul.mubr.f32.gmra.mxu0 %v1037
    %v1116 = vpop.f32.mrf.mxu0
    %v1117 = vadd.f32 %v1020, %v1116
    %v1118 = vpop.f32.mrf.mxu0
    %1119 = vmatprep.mubr.f32.mxu0 0.0
    %1120 = vmatmul.mubr.f32.gmra.mxu0 %v1040
    %v1121 = vpop.f32.mrf.mxu0
    %v1122 = vadd.f32 %v1025, %v1121
    %v1123 = vpop.f32.mrf.mxu0
    %1124 = vmatprep.mubr.f32.mxu0 0.0
    %1125 = vmatmul.mubr.f32.gmra.mxu0 %v1043
    %v1126 = vpop.f32.mrf.mxu0
    %v1127 = vadd.f32 %v1030, %v1126
    %v1128 = vpop.f32.mrf.mxu0
    %1129 = vdwg.mxu0
    %s1130 = sld [smem:[#allocation2 + $0x18]]
    %s1131 = sld [smem:[#allocation2 + $0x19]]
    %s1132 = sld [smem:[#allocation2 + $0x1a]]
    %s1133 = sld [smem:[#allocation2 + $0x1b]]
    %s1134 = sld [smem:[#allocation2 + $0x1c]]
    %s1135 = sld [smem:[#allocation2 + $0x1d]]
    %s1136 = sld [smem:[#allocation2 + $0x1e]]
    %s1137 = sld [smem:[#allocation2 + $0x1f]]
    %s1138 = sadd.f32 %s1130, %s1134
    %s1139 = sadd.f32 %s1131, %s1135
    %s1140 = sadd.f32 %s1132, %s1136
    %s1141 = sadd.f32 %s1133, %s1137
    %v1142 = vstv %s1141
    %v1143 = vmul.f32 %v1142, %v1112
    %v1144 = vmul.f32 %v1142, %v1117
    %v1145 = vmul.f32 %v1142, %v1122
    %v1146 = vmul.f32 %v1142, %v1127
    %v1147 = vstv %s1138
    %v1148 = vadd.f32 %v1147, %v1143
    %v1149 = vadd.f32 %v1147, %v1144
    %v1150 = vadd.f32 %v1147, %v1145
    %v1151 = vadd.f32 %v1147, %v1146
    %v1152 = vmul.f32 %v1112, %v1148
    %v1153 = vmul.f32 %v1117, %v1149
    %v1154 = vmul.f32 %v1122, %v1150
    %v1155 = vmul.f32 %v1127, %v1151
    %v1156 = vmax.f32 %v1112, 0.0
    %v1157 = vmax.f32 %v1117, 0.0
    %v1158 = vmax.f32 %v1122, 0.0
    %v1159 = vmax.f32 %v1127, 0.0
    %v1160 = vstv %s1139
    %v1161 = vmul.f32 %v1160, %v1156
    %v1162 = vmul.f32 %v1160, %v1157
    %v1163 = vmul.f32 %v1160, %v1158
    %v1164 = vmul.f32 %v1160, %v1159
    %v1165 = vadd.f32 %v1152, %v1161
    %v1166 = vadd.f32 %v1153, %v1162
    %v1167 = vadd.f32 %v1154, %v1163
    %v1168 = vadd.f32 %v1155, %v1164
    %v1169 = vtanh.pop %v1112
    %v1170 = vtanh.pop %v1117
    %v1171 = vtanh.pop %v1122
    %v1172 = vtanh.pop %v1127
    %v1173 = vstv %s1140
    %v1174 = vmul.f32 %v1173, %v1169
    %v1175 = vmul.f32 %v1173, %v1170
    %v1176 = vmul.f32 %v1173, %v1171
    %v1177 = vmul.f32 %v1173, %v1172
    %v1178 = vadd.f32 %v1165, %v1174
    %v1179 = vadd.f32 %v1166, %v1175
    %v1180 = vadd.f32 %v1167, %v1176
    %v1181 = vadd.f32 %v1168, %v1177
    %s1182 = sld [smem:[#allocation2 + $0x24]]
    %s1183 = sld [smem:[#allocation2 + $0x25]]
    %s1184 = sld [smem:[#allocation2 + $0x26]]
    %s1185 = sld [smem:[#allocation2 + $0x27]]
    %s1186 = sld [smem:[#allocation2 + $0x28]]
    %s1187 = sld [smem:[#allocation2 + $0x29]]
    %s1188 = sld [smem:[#allocation2 + $0x2a]]
    %s1189 = sld [smem:[#allocation2 + $0x2b]]
    %s1190 = sadd.f32 %s1182, %s1186
    %s1191 = sadd.f32 %s1183, %s1187
    %s1192 = sadd.f32 %s1184, %s1188
    %s1193 = sadd.f32 %s1185, %s1189
    %s1194 = sld [smem:[#allocation2 + $0x2c]]
    %s1195 = sld [smem:[#allocation2 + $0x2d]]
    %s1196 = sld [smem:[#allocation2 + $0x2e]]
    %s1197 = sld [smem:[#allocation2 + $0x2f]]
    %v1198 = vstv %s1193
    %v1199 = vmul.f32 %v1198, %v1112
    %v1200 = vmul.f32 %v1198, %v1117
    %v1201 = vmul.f32 %v1198, %v1122
    %v1202 = vmul.f32 %v1198, %v1127
    %v1203 = vstv %s1190
    %v1204 = vadd.f32 %v1203, %v1199
    %v1205 = vadd.f32 %v1203, %v1200
    %v1206 = vadd.f32 %v1203, %v1201
    %v1207 = vadd.f32 %v1203, %v1202
    %v1208 = vmul.f32 %v1112, %v1204
    %v1209 = vmul.f32 %v1117, %v1205
    %v1210 = vmul.f32 %v1122, %v1206
    %v1211 = vmul.f32 %v1127, %v1207
    %v1212 = vstv %s1191
    %v1213 = vmul.f32 %v1212, %v1156
    %v1214 = vmul.f32 %v1212, %v1157
    %v1215 = vmul.f32 %v1212, %v1158
    %v1216 = vmul.f32 %v1212, %v1159
    %v1217 = vadd.f32 %v1208, %v1213
    %v1218 = vadd.f32 %v1209, %v1214
    %v1219 = vadd.f32 %v1210, %v1215
    %v1220 = vadd.f32 %v1211, %v1216
    %v1221 = vstv %s1192
    %v1222 = vmul.f32 %v1221, %v1169
    %v1223 = vmul.f32 %v1221, %v1170
    %v1224 = vmul.f32 %v1221, %v1171
    %v1225 = vmul.f32 %v1221, %v1172
    %v1226 = vadd.f32 %v1217, %v1222
    %v1227 = vadd.f32 %v1218, %v1223
    %v1228 = vadd.f32 %v1219, %v1224
    %v1229 = vadd.f32 %v1220, %v1225
    %v1230 = vstv %s1197
    %v1231 = vmul.f32 %v1230, %v1178
    %v1232 = vmul.f32 %v1230, %v1179
    %v1233 = vmul.f32 %v1230, %v1180
    %v1234 = vmul.f32 %v1230, %v1181
    %v1235 = vstv %s1194
    %v1236 = vadd.f32 %v1235, %v1231
    %v1237 = vadd.f32 %v1235, %v1232
    %v1238 = vadd.f32 %v1235, %v1233
    %v1239 = vadd.f32 %v1235, %v1234
    %v1240 = vmul.f32 %v1178, %v1236
    %v1241 = vmul.f32 %v1179, %v1237
    %v1242 = vmul.f32 %v1180, %v1238
    %v1243 = vmul.f32 %v1181, %v1239
    %v1244 = vmax.f32 %v1178, 0.0
    %v1245 = vmax.f32 %v1179, 0.0
    %v1246 = vmax.f32 %v1180, 0.0
    %v1247 = vmax.f32 %v1181, 0.0
    %v1248 = vstv %s1195
    %v1249 = vmul.f32 %v1248, %v1244
    %v1250 = vmul.f32 %v1248, %v1245
    %v1251 = vmul.f32 %v1248, %v1246
    %v1252 = vmul.f32 %v1248, %v1247
    %v1253 = vadd.f32 %v1240, %v1249
    %v1254 = vadd.f32 %v1241, %v1250
    %v1255 = vadd.f32 %v1242, %v1251
    %v1256 = vadd.f32 %v1243, %v1252
    %v1257 = vtanh.pop %v1178
    %v1258 = vtanh.pop %v1179
    %v1259 = vtanh.pop %v1180
    %v1260 = vtanh.pop %v1181
    %v1261 = vstv %s1196
    %v1262 = vmul.f32 %v1261, %v1257
    %v1263 = vmul.f32 %v1261, %v1258
    %v1264 = vmul.f32 %v1261, %v1259
    %v1265 = vmul.f32 %v1261, %v1260
    %v1266 = vadd.f32 %v1253, %v1262
    %v1267 = vadd.f32 %v1254, %v1263
    %v1268 = vadd.f32 %v1255, %v1264
    %v1269 = vadd.f32 %v1256, %v1265
    %v1270 = vadd.f32 %v1226, %v1266
    %v1271 = vadd.f32 %v1227, %v1267
    %v1272 = vadd.f32 %v1228, %v1268
    %v1273 = vadd.f32 %v1229, %v1269
    %v1274 = vld [vmem:[%s7] sm:$0xf]
    %v1275 = vld [vmem:[%s7 + $0x4] sm:$0xf]
    %v1276 = vld [vmem:[%s7 + $0x8] sm:$0xf]
    %v1277 = vld [vmem:[%s7 + $0xc] sm:$0xf]
    %v1278 = vld [vmem:[%s7 + $0x10] sm:$0xf]
    %v1279 = vld [vmem:[%s7 + $0x14] sm:$0xf]
    %v1280 = vld [vmem:[%s7 + $0x18] sm:$0xf]
    %v1281 = vld [vmem:[%s7 + $0x1c] sm:$0xf]
    %v1282 = vld [vmem:[%s7 + $0x20] sm:$0xf]
    %v1283 = vld [vmem:[%s7 + $0x24] sm:$0xf]
    %v1284 = vld [vmem:[%s7 + $0x28] sm:$0xf]
    %v1285 = vld [vmem:[%s7 + $0x2c] sm:$0xf]
    %v1286 = vld [vmem:[%s7 + $0x30] sm:$0xf]
    %v1287 = vld [vmem:[%s7 + $0x34] sm:$0xf]
    %v1288 = vld [vmem:[%s7 + $0x38] sm:$0xf]
    %v1289 = vld [vmem:[%s7 + $0x3c] sm:$0xf]
    %v1290 = vunpack.c.l.bf16 %v1274
    %v1291 = vunpack.c.l.bf16 %v1275
    %v1292 = vunpack.c.l.bf16 %v1276
    %v1293 = vunpack.c.l.bf16 %v1277
    %v1294 = vunpack.c.l.bf16 %v1278
    %v1295 = vunpack.c.l.bf16 %v1279
    %v1296 = vunpack.c.l.bf16 %v1280
    %v1297 = vunpack.c.l.bf16 %v1281
    %v1298 = vunpack.c.l.bf16 %v1282
    %v1299 = vunpack.c.l.bf16 %v1283
    %v1300 = vunpack.c.l.bf16 %v1284
    %v1301 = vunpack.c.l.bf16 %v1285
    %v1302 = vunpack.c.l.bf16 %v1286
    %v1303 = vunpack.c.l.bf16 %v1287
    %v1304 = vunpack.c.l.bf16 %v1288
    %v1305 = vunpack.c.l.bf16 %v1289
    %1306 = vmatprep.subr.mxu0 0.0
    %1307 = vmatpush1.msra.mxu0 %v1305
    %1308 = vmatprep.subr.mxu0 0.0
    %1309 = vmatpush1.msra.mxu0 %v1304
    %1310 = vmatprep.subr.mxu0 0.0
    %1311 = vmatpush1.msra.mxu0 %v1303
    %1312 = vmatprep.subr.mxu0 0.0
    %1313 = vmatpush1.msra.mxu0 %v1302
    %1314 = vmatprep.subr.mxu0 0.0
    %1315 = vmatpush1.msra.mxu0 %v1301
    %1316 = vmatprep.subr.mxu0 0.0
    %1317 = vmatpush1.msra.mxu0 %v1300
    %1318 = vmatprep.subr.mxu0 0.0
    %1319 = vmatpush1.msra.mxu0 %v1299
    %1320 = vmatprep.subr.mxu0 0.0
    %1321 = vmatpush1.msra.mxu0 %v1298
    %1322 = vmatprep.subr.mxu0 0.0
    %1323 = vmatpush1.msra.mxu0 %v1297
    %1324 = vmatprep.subr.mxu0 0.0
    %1325 = vmatpush1.msra.mxu0 %v1296
    %1326 = vmatprep.subr.mxu0 0.0
    %1327 = vmatpush1.msra.mxu0 %v1295
    %1328 = vmatprep.subr.mxu0 0.0
    %1329 = vmatpush1.msra.mxu0 %v1294
    %1330 = vmatprep.subr.mxu0 0.0
    %1331 = vmatpush1.msra.mxu0 %v1293
    %1332 = vmatprep.subr.mxu0 0.0
    %1333 = vmatpush1.msra.mxu0 %v1292
    %1334 = vmatprep.subr.mxu0 0.0
    %1335 = vmatpush1.msra.mxu0 %v1291
    %1336 = vmatprep.subr.mxu0 0.0
    %1337 = vmatpush1.msra.mxu0 %v1290
    %1338 = vmatprep.subr.mxu0 0.0
    %1339 = vmatpush2.msra.mxu0 0.0
    %1340 = vmatprep.subr.mxu0 0.0
    %1341 = vmatpush2.msra.mxu0 0.0
    %1342 = vmatprep.subr.mxu0 0.0
    %1343 = vmatpush2.msra.mxu0 0.0
    %1344 = vmatprep.subr.mxu0 0.0
    %1345 = vmatpush2.msra.mxu0 0.0
    %1346 = vmatprep.subr.mxu0 0.0
    %1347 = vmatpush2.msra.mxu0 0.0
    %1348 = vmatprep.subr.mxu0 0.0
    %1349 = vmatpush2.msra.mxu0 0.0
    %1350 = vmatprep.subr.mxu0 0.0
    %1351 = vmatpush2.msra.mxu0 0.0
    %1352 = vmatprep.subr.mxu0 0.0
    %1353 = vmatpush2.msra.mxu0 0.0
    %1354 = vmatprep.subr.mxu0 0.0
    %1355 = vmatpush2.msra.mxu0 0.0
    %1356 = vmatprep.subr.mxu0 0.0
    %1357 = vmatpush2.msra.mxu0 0.0
    %1358 = vmatprep.subr.mxu0 0.0
    %1359 = vmatpush2.msra.mxu0 0.0
    %1360 = vmatprep.subr.mxu0 0.0
    %1361 = vmatpush2.msra.mxu0 0.0
    %1362 = vmatprep.subr.mxu0 0.0
    %1363 = vmatpush2.msra.mxu0 0.0
    %1364 = vmatprep.subr.mxu0 0.0
    %1365 = vmatpush2.msra.mxu0 0.0
    %1366 = vmatprep.subr.mxu0 0.0
    %1367 = vmatpush2.msra.mxu0 0.0
    %1368 = vmatprep.subr.mxu0 0.0
    %1369 = vmatpush2.msra.mxu0 0.0
    %1370 = vmatprep.mubr.f32.mxu0 0.0
    %1371 = vmatmul.mubr.f32.gmra.mxu0 %v1178
    %v1372 = vpop.f32.mrf.mxu0
    %v1373 = vadd.f32 0.0, %v1372
    %v1374 = vpop.f32.mrf.mxu0
    %1375 = vmatprep.mubr.f32.mxu0 0.0
    %1376 = vmatmul.mubr.f32.gmra.mxu0 %v1179
    %v1377 = vpop.f32.mrf.mxu0
    %v1378 = vadd.f32 0.0, %v1377
    %v1379 = vpop.f32.mrf.mxu0
    %1380 = vmatprep.mubr.f32.mxu0 0.0
    %1381 = vmatmul.mubr.f32.gmra.mxu0 %v1180
    %v1382 = vpop.f32.mrf.mxu0
    %v1383 = vadd.f32 0.0, %v1382
    %v1384 = vpop.f32.mrf.mxu0
    %1385 = vmatprep.mubr.f32.mxu0 0.0
    %1386 = vmatmul.mubr.f32.gmra.mxu0 %v1181
    %v1387 = vpop.f32.mrf.mxu0
    %v1388 = vadd.f32 0.0, %v1387
    %v1389 = vpop.f32.mrf.mxu0
    %1390 = vdwg.mxu0
    %1391 = vmatprep.subr.mxu0 0.0
    %1392 = vmatpush1.msra.mxu0 %v1305
    %1393 = vmatprep.subr.mxu0 0.0
    %1394 = vmatpush1.msra.mxu0 %v1304
    %1395 = vmatprep.subr.mxu0 0.0
    %1396 = vmatpush1.msra.mxu0 %v1303
    %1397 = vmatprep.subr.mxu0 0.0
    %1398 = vmatpush1.msra.mxu0 %v1302
    %1399 = vmatprep.subr.mxu0 0.0
    %1400 = vmatpush1.msra.mxu0 %v1301
    %1401 = vmatprep.subr.mxu0 0.0
    %1402 = vmatpush1.msra.mxu0 %v1300
    %1403 = vmatprep.subr.mxu0 0.0
    %1404 = vmatpush1.msra.mxu0 %v1299
    %1405 = vmatprep.subr.mxu0 0.0
    %1406 = vmatpush1.msra.mxu0 %v1298
    %1407 = vmatprep.subr.mxu0 0.0
    %1408 = vmatpush1.msra.mxu0 %v1297
    %1409 = vmatprep.subr.mxu0 0.0
    %1410 = vmatpush1.msra.mxu0 %v1296
    %1411 = vmatprep.subr.mxu0 0.0
    %1412 = vmatpush1.msra.mxu0 %v1295
    %1413 = vmatprep.subr.mxu0 0.0
    %1414 = vmatpush1.msra.mxu0 %v1294
    %1415 = vmatprep.subr.mxu0 0.0
    %1416 = vmatpush1.msra.mxu0 %v1293
    %1417 = vmatprep.subr.mxu0 0.0
    %1418 = vmatpush1.msra.mxu0 %v1292
    %1419 = vmatprep.subr.mxu0 0.0
    %1420 = vmatpush1.msra.mxu0 %v1291
    %1421 = vmatprep.subr.mxu0 0.0
    %1422 = vmatpush1.msra.mxu0 %v1290
    %1423 = vmatprep.subr.mxu0 0.0
    %1424 = vmatpush2.msra.mxu0 0.0
    %1425 = vmatprep.subr.mxu0 0.0
    %1426 = vmatpush2.msra.mxu0 0.0
    %1427 = vmatprep.subr.mxu0 0.0
    %1428 = vmatpush2.msra.mxu0 0.0
    %1429 = vmatprep.subr.mxu0 0.0
    %1430 = vmatpush2.msra.mxu0 0.0
    %1431 = vmatprep.subr.mxu0 0.0
    %1432 = vmatpush2.msra.mxu0 0.0
    %1433 = vmatprep.subr.mxu0 0.0
    %1434 = vmatpush2.msra.mxu0 0.0
    %1435 = vmatprep.subr.mxu0 0.0
    %1436 = vmatpush2.msra.mxu0 0.0
    %1437 = vmatprep.subr.mxu0 0.0
    %1438 = vmatpush2.msra.mxu0 0.0
    %1439 = vmatprep.subr.mxu0 0.0
    %1440 = vmatpush2.msra.mxu0 0.0
    %1441 = vmatprep.subr.mxu0 0.0
    %1442 = vmatpush2.msra.mxu0 0.0
    %1443 = vmatprep.subr.mxu0 0.0
    %1444 = vmatpush2.msra.mxu0 0.0
    %1445 = vmatprep.subr.mxu0 0.0
    %1446 = vmatpush2.msra.mxu0 0.0
    %1447 = vmatprep.subr.mxu0 0.0
    %1448 = vmatpush2.msra.mxu0 0.0
    %1449 = vmatprep.subr.mxu0 0.0
    %1450 = vmatpush2.msra.mxu0 0.0
    %1451 = vmatprep.subr.mxu0 0.0
    %1452 = vmatpush2.msra.mxu0 0.0
    %1453 = vmatprep.subr.mxu0 0.0
    %1454 = vmatpush2.msra.mxu0 0.0
    %1455 = vmatprep.mubr.f32.mxu0 0.0
    %1456 = vmatmul.mubr.f32.gmra.mxu0 %v1270
    %v1457 = vpop.f32.mrf.mxu0
    %v1458 = vadd.f32 0.0, %v1457
    %v1459 = vpop.f32.mrf.mxu0
    %1460 = vmatprep.mubr.f32.mxu0 0.0
    %1461 = vmatmul.mubr.f32.gmra.mxu0 %v1271
    %v1462 = vpop.f32.mrf.mxu0
    %v1463 = vadd.f32 0.0, %v1462
    %v1464 = vpop.f32.mrf.mxu0
    %1465 = vmatprep.mubr.f32.mxu0 0.0
    %1466 = vmatmul.mubr.f32.gmra.mxu0 %v1272
    %v1467 = vpop.f32.mrf.mxu0
    %v1468 = vadd.f32 0.0, %v1467
    %v1469 = vpop.f32.mrf.mxu0
    %1470 = vmatprep.mubr.f32.mxu0 0.0
    %1471 = vmatmul.mubr.f32.gmra.mxu0 %v1273
    %v1472 = vpop.f32.mrf.mxu0
    %v1473 = vadd.f32 0.0, %v1472
    %v1474 = vpop.f32.mrf.mxu0
    %1475 = vdwg.mxu0
    %v1476 = vld [vmem:[%s8] sm:$0xff]
    %v1477 = vld [vmem:[%s8 + $0x8] sm:$0xff]
    %v1478 = vld [vmem:[%s8 + $0x10] sm:$0xff]
    %v1479 = vld [vmem:[%s8 + $0x18] sm:$0xff]
    %v1480 = vld [vmem:[%s8 + $0x20] sm:$0xff]
    %v1481 = vld [vmem:[%s8 + $0x28] sm:$0xff]
    %v1482 = vld [vmem:[%s8 + $0x30] sm:$0xff]
    %v1483 = vld [vmem:[%s8 + $0x38] sm:$0xff]
    %v1484 = vld [vmem:[%s9] sm:$0xff]
    %v1485 = vld [vmem:[%s9 + $0x8] sm:$0xff]
    %v1486 = vld [vmem:[%s9 + $0x10] sm:$0xff]
    %v1487 = vld [vmem:[%s9 + $0x18] sm:$0xff]
    %v1488 = vld [vmem:[%s9 + $0x20] sm:$0xff]
    %v1489 = vld [vmem:[%s9 + $0x28] sm:$0xff]
    %v1490 = vld [vmem:[%s9 + $0x30] sm:$0xff]
    %v1491 = vld [vmem:[%s9 + $0x38] sm:$0xff]
    %v1493 = vsel %vm90, %v1484, 0
    %v1496 = vsel %vm90, %v1485, 0
    %v1499 = vsel %vm90, %v1486, 0
    %v1502 = vsel %vm90, %v1487, 0
    %v1505 = vsel %vm90, %v1488, 0
    %v1508 = vsel %vm90, %v1489, 0
    %v1511 = vsel %vm90, %v1490, 0
    %v1514 = vsel %vm90, %v1491, 0
    %1516 = vmatprep.subr.mxu0 0.0
    %1517 = vmatpush1.msra.mxu0 0.0
    %1518 = vmatprep.subr.mxu0 0.0
    %1519 = vmatpush1.msra.mxu0 0.0
    %1520 = vmatprep.subr.mxu0 0.0
    %1521 = vmatpush1.msra.mxu0 0.0
    %1522 = vmatprep.subr.mxu0 0.0
    %1523 = vmatpush1.msra.mxu0 0.0
    %1524 = vmatprep.subr.mxu0 0.0
    %1525 = vmatpush1.msra.mxu0 0.0
    %1526 = vmatprep.subr.mxu0 0.0
    %1527 = vmatpush1.msra.mxu0 0.0
    %1528 = vmatprep.subr.mxu0 0.0
    %1529 = vmatpush1.msra.mxu0 0.0
    %1530 = vmatprep.subr.mxu0 0.0
    %1531 = vmatpush1.msra.mxu0 0.0
    %1532 = vmatprep.subr.mxu0 0.0
    %1533 = vmatpush1.msra.mxu0 0.0
    %1534 = vmatprep.subr.mxu0 0.0
    %1535 = vmatpush1.msra.mxu0 0.0
    %1536 = vmatprep.subr.mxu0 0.0
    %1537 = vmatpush1.msra.mxu0 0.0
    %1538 = vmatprep.subr.mxu0 0.0
    %1539 = vmatpush1.msra.mxu0 0.0
    %1540 = vmatprep.subr.mxu0 0.0
    %1541 = vmatpush1.msra.mxu0 %v1473
    %1542 = vmatprep.subr.mxu0 0.0
    %1543 = vmatpush1.msra.mxu0 %v1468
    %1544 = vmatprep.subr.mxu0 0.0
    %1545 = vmatpush1.msra.mxu0 %v1463
    %1546 = vmatprep.subr.mxu0 0.0
    %1547 = vmatpush1.msra.mxu0 %v1458
    %1548 = vmatprep.subr.mxu0 0.0
    %1549 = vmatpush2.msra.mxu0 0.0
    %1550 = vmatprep.subr.mxu0 0.0
    %1551 = vmatpush2.msra.mxu0 0.0
    %1552 = vmatprep.subr.mxu0 0.0
    %1553 = vmatpush2.msra.mxu0 0.0
    %1554 = vmatprep.subr.mxu0 0.0
    %1555 = vmatpush2.msra.mxu0 0.0
    %1556 = vmatprep.subr.mxu0 0.0
    %1557 = vmatpush2.msra.mxu0 0.0
    %1558 = vmatprep.subr.mxu0 0.0
    %1559 = vmatpush2.msra.mxu0 0.0
    %1560 = vmatprep.subr.mxu0 0.0
    %1561 = vmatpush2.msra.mxu0 0.0
    %1562 = vmatprep.subr.mxu0 0.0
    %1563 = vmatpush2.msra.mxu0 0.0
    %1564 = vmatprep.subr.mxu0 0.0
    %1565 = vmatpush2.msra.mxu0 0.0
    %1566 = vmatprep.subr.mxu0 0.0
    %1567 = vmatpush2.msra.mxu0 0.0
    %1568 = vmatprep.subr.mxu0 0.0
    %1569 = vmatpush2.msra.mxu0 0.0
    %1570 = vmatprep.subr.mxu0 0.0
    %1571 = vmatpush2.msra.mxu0 0.0
    %1572 = vmatprep.subr.mxu0 0.0
    %1573 = vmatpush2.msra.mxu0 0.0
    %1574 = vmatprep.subr.mxu0 0.0
    %1575 = vmatpush2.msra.mxu0 0.0
    %1576 = vmatprep.subr.mxu0 0.0
    %1577 = vmatpush2.msra.mxu0 0.0
    %1578 = vmatprep.subr.mxu0 0.0
    %1579 = vmatpush2.msra.mxu0 0.0
    %1580 = vmatprep.mubr.f32.mxu0 0.0
    %1581 = vmatmul.mubr.f32.gmra.mxu0 %v1493
    %v1582 = vpop.f32.mrf.mxu0
    %v1583 = vadd.f32 0.0, %v1582
    %v1584 = vpop.f32.mrf.mxu0
    %1585 = vmatprep.mubr.f32.mxu0 0.0
    %1586 = vmatmul.mubr.f32.gmra.mxu0 %v1496
    %v1587 = vpop.f32.mrf.mxu0
    %v1588 = vadd.f32 0.0, %v1587
    %v1589 = vpop.f32.mrf.mxu0
    %1590 = vmatprep.mubr.f32.mxu0 0.0
    %1591 = vmatmul.mubr.f32.gmra.mxu0 %v1499
    %v1592 = vpop.f32.mrf.mxu0
    %v1593 = vadd.f32 0.0, %v1592
    %v1594 = vpop.f32.mrf.mxu0
    %1595 = vmatprep.mubr.f32.mxu0 0.0
    %1596 = vmatmul.mubr.f32.gmra.mxu0 %v1502
    %v1597 = vpop.f32.mrf.mxu0
    %v1598 = vadd.f32 0.0, %v1597
    %v1599 = vpop.f32.mrf.mxu0
    %1600 = vmatprep.mubr.f32.mxu0 0.0
    %1601 = vmatmul.mubr.f32.gmra.mxu0 %v1505
    %v1602 = vpop.f32.mrf.mxu0
    %v1603 = vadd.f32 0.0, %v1602
    %v1604 = vpop.f32.mrf.mxu0
    %1605 = vmatprep.mubr.f32.mxu0 0.0
    %1606 = vmatmul.mubr.f32.gmra.mxu0 %v1508
    %v1607 = vpop.f32.mrf.mxu0
    %v1608 = vadd.f32 0.0, %v1607
    %v1609 = vpop.f32.mrf.mxu0
    %1610 = vmatprep.mubr.f32.mxu0 0.0
    %1611 = vmatmul.mubr.f32.gmra.mxu0 %v1511
    %v1612 = vpop.f32.mrf.mxu0
    %v1613 = vadd.f32 0.0, %v1612
    %v1614 = vpop.f32.mrf.mxu0
    %1615 = vmatprep.mubr.f32.mxu0 0.0
    %1616 = vmatmul.mubr.f32.gmra.mxu0 %v1514
    %v1617 = vpop.f32.mrf.mxu0
    %v1618 = vadd.f32 0.0, %v1617
    %v1619 = vpop.f32.mrf.mxu0
    %1620 = vdwg.mxu0
    %v1622 = vsel %vm90, %v1476, 0
    %v1625 = vsel %vm90, %v1477, 0
    %v1628 = vsel %vm90, %v1478, 0
    %v1631 = vsel %vm90, %v1479, 0
    %v1634 = vsel %vm90, %v1480, 0
    %v1637 = vsel %vm90, %v1481, 0
    %v1640 = vsel %vm90, %v1482, 0
    %v1643 = vsel %vm90, %v1483, 0
    %1645 = vmatprep.subr.mxu0 0.0
    %1646 = vmatpush1.msra.mxu0 0.0
    %1647 = vmatprep.subr.mxu0 0.0
    %1648 = vmatpush1.msra.mxu0 0.0
    %1649 = vmatprep.subr.mxu0 0.0
    %1650 = vmatpush1.msra.mxu0 0.0
    %1651 = vmatprep.subr.mxu0 0.0
    %1652 = vmatpush1.msra.mxu0 0.0
    %1653 = vmatprep.subr.mxu0 0.0
    %1654 = vmatpush1.msra.mxu0 0.0
    %1655 = vmatprep.subr.mxu0 0.0
    %1656 = vmatpush1.msra.mxu0 0.0
    %1657 = vmatprep.subr.mxu0 0.0
    %1658 = vmatpush1.msra.mxu0 0.0
    %1659 = vmatprep.subr.mxu0 0.0
    %1660 = vmatpush1.msra.mxu0 0.0
    %1661 = vmatprep.subr.mxu0 0.0
    %1662 = vmatpush1.msra.mxu0 0.0
    %1663 = vmatprep.subr.mxu0 0.0
    %1664 = vmatpush1.msra.mxu0 0.0
    %1665 = vmatprep.subr.mxu0 0.0
    %1666 = vmatpush1.msra.mxu0 0.0
    %1667 = vmatprep.subr.mxu0 0.0
    %1668 = vmatpush1.msra.mxu0 0.0
    %1669 = vmatprep.subr.mxu0 0.0
    %1670 = vmatpush1.msra.mxu0 %v1388
    %1671 = vmatprep.subr.mxu0 0.0
    %1672 = vmatpush1.msra.mxu0 %v1383
    %1673 = vmatprep.subr.mxu0 0.0
    %1674 = vmatpush1.msra.mxu0 %v1378
    %1675 = vmatprep.subr.mxu0 0.0
    %1676 = vmatpush1.msra.mxu0 %v1373
    %1677 = vmatprep.subr.mxu0 0.0
    %1678 = vmatpush2.msra.mxu0 0.0
    %1679 = vmatprep.subr.mxu0 0.0
    %1680 = vmatpush2.msra.mxu0 0.0
    %1681 = vmatprep.subr.mxu0 0.0
    %1682 = vmatpush2.msra.mxu0 0.0
    %1683 = vmatprep.subr.mxu0 0.0
    %1684 = vmatpush2.msra.mxu0 0.0
    %1685 = vmatprep.subr.mxu0 0.0
    %1686 = vmatpush2.msra.mxu0 0.0
    %1687 = vmatprep.subr.mxu0 0.0
    %1688 = vmatpush2.msra.mxu0 0.0
    %1689 = vmatprep.subr.mxu0 0.0
    %1690 = vmatpush2.msra.mxu0 0.0
    %1691 = vmatprep.subr.mxu0 0.0
    %1692 = vmatpush2.msra.mxu0 0.0
    %1693 = vmatprep.subr.mxu0 0.0
    %1694 = vmatpush2.msra.mxu0 0.0
    %1695 = vmatprep.subr.mxu0 0.0
    %1696 = vmatpush2.msra.mxu0 0.0
    %1697 = vmatprep.subr.mxu0 0.0
    %1698 = vmatpush2.msra.mxu0 0.0
    %1699 = vmatprep.subr.mxu0 0.0
    %1700 = vmatpush2.msra.mxu0 0.0
    %1701 = vmatprep.subr.mxu0 0.0
    %1702 = vmatpush2.msra.mxu0 0.0
    %1703 = vmatprep.subr.mxu0 0.0
    %1704 = vmatpush2.msra.mxu0 0.0
    %1705 = vmatprep.subr.mxu0 0.0
    %1706 = vmatpush2.msra.mxu0 0.0
    %1707 = vmatprep.subr.mxu0 0.0
    %1708 = vmatpush2.msra.mxu0 0.0
    %1709 = vmatprep.mubr.f32.mxu0 0.0
    %1710 = vmatmul.mubr.f32.gmra.mxu0 %v1622
    %v1711 = vpop.f32.mrf.mxu0
    %v1712 = vadd.f32 %v1583, %v1711
    %v1713 = vpop.f32.mrf.mxu0
    %1714 = vmatprep.mubr.f32.mxu0 0.0
    %1715 = vmatmul.mubr.f32.gmra.mxu0 %v1625
    %v1716 = vpop.f32.mrf.mxu0
    %v1717 = vadd.f32 %v1588, %v1716
    %v1718 = vpop.f32.mrf.mxu0
    %1719 = vmatprep.mubr.f32.mxu0 0.0
    %1720 = vmatmul.mubr.f32.gmra.mxu0 %v1628
    %v1721 = vpop.f32.mrf.mxu0
    %v1722 = vadd.f32 %v1593, %v1721
    %v1723 = vpop.f32.mrf.mxu0
    %1724 = vmatprep.mubr.f32.mxu0 0.0
    %1725 = vmatmul.mubr.f32.gmra.mxu0 %v1631
    %v1726 = vpop.f32.mrf.mxu0
    %v1727 = vadd.f32 %v1598, %v1726
    %v1728 = vpop.f32.mrf.mxu0
    %1729 = vmatprep.mubr.f32.mxu0 0.0
    %1730 = vmatmul.mubr.f32.gmra.mxu0 %v1634
    %v1731 = vpop.f32.mrf.mxu0
    %v1732 = vadd.f32 %v1603, %v1731
    %v1733 = vpop.f32.mrf.mxu0
    %1734 = vmatprep.mubr.f32.mxu0 0.0
    %1735 = vmatmul.mubr.f32.gmra.mxu0 %v1637
    %v1736 = vpop.f32.mrf.mxu0
    %v1737 = vadd.f32 %v1608, %v1736
    %v1738 = vpop.f32.mrf.mxu0
    %1739 = vmatprep.mubr.f32.mxu0 0.0
    %1740 = vmatmul.mubr.f32.gmra.mxu0 %v1640
    %v1741 = vpop.f32.mrf.mxu0
    %v1742 = vadd.f32 %v1613, %v1741
    %v1743 = vpop.f32.mrf.mxu0
    %1744 = vmatprep.mubr.f32.mxu0 0.0
    %1745 = vmatmul.mubr.f32.gmra.mxu0 %v1643
    %v1746 = vpop.f32.mrf.mxu0
    %v1747 = vadd.f32 %v1618, %v1746
    %v1748 = vpop.f32.mrf.mxu0
    %1749 = vdwg.mxu0
    %s1750 = sld [smem:[#allocation2 + $0x30]]
    %s1751 = sld [smem:[#allocation2 + $0x31]]
    %s1752 = sld [smem:[#allocation2 + $0x32]]
    %s1753 = sld [smem:[#allocation2 + $0x33]]
    %s1754 = sld [smem:[#allocation2 + $0x34]]
    %s1755 = sld [smem:[#allocation2 + $0x35]]
    %s1756 = sld [smem:[#allocation2 + $0x36]]
    %s1757 = sld [smem:[#allocation2 + $0x37]]
    %s1758 = sadd.f32 %s1750, %s1754
    %s1759 = sadd.f32 %s1751, %s1755
    %s1760 = sadd.f32 %s1752, %s1756
    %s1761 = sadd.f32 %s1753, %s1757
    %v1762 = vstv %s1761
    %v1763 = vmul.f32 %v1762, %v1712
    %v1764 = vmul.f32 %v1762, %v1717
    %v1765 = vmul.f32 %v1762, %v1722
    %v1766 = vmul.f32 %v1762, %v1727
    %v1767 = vmul.f32 %v1762, %v1732
    %v1768 = vmul.f32 %v1762, %v1737
    %v1769 = vmul.f32 %v1762, %v1742
    %v1770 = vmul.f32 %v1762, %v1747
    %v1771 = vstv %s1758
    %v1772 = vadd.f32 %v1771, %v1763
    %v1773 = vadd.f32 %v1771, %v1764
    %v1774 = vadd.f32 %v1771, %v1765
    %v1775 = vadd.f32 %v1771, %v1766
    %v1776 = vadd.f32 %v1771, %v1767
    %v1777 = vadd.f32 %v1771, %v1768
    %v1778 = vadd.f32 %v1771, %v1769
    %v1779 = vadd.f32 %v1771, %v1770
    %v1780 = vmul.f32 %v1712, %v1772
    %v1781 = vmul.f32 %v1717, %v1773
    %v1782 = vmul.f32 %v1722, %v1774
    %v1783 = vmul.f32 %v1727, %v1775
    %v1784 = vmul.f32 %v1732, %v1776
    %v1785 = vmul.f32 %v1737, %v1777
    %v1786 = vmul.f32 %v1742, %v1778
    %v1787 = vmul.f32 %v1747, %v1779
    %v1788 = vmax.f32 %v1712, 0.0
    %v1789 = vmax.f32 %v1717, 0.0
    %v1790 = vmax.f32 %v1722, 0.0
    %v1791 = vmax.f32 %v1727, 0.0
    %v1792 = vmax.f32 %v1732, 0.0
    %v1793 = vmax.f32 %v1737, 0.0
    %v1794 = vmax.f32 %v1742, 0.0
    %v1795 = vmax.f32 %v1747, 0.0
    %v1796 = vstv %s1759
    %v1797 = vmul.f32 %v1796, %v1788
    %v1798 = vmul.f32 %v1796, %v1789
    %v1799 = vmul.f32 %v1796, %v1790
    %v1800 = vmul.f32 %v1796, %v1791
    %v1801 = vmul.f32 %v1796, %v1792
    %v1802 = vmul.f32 %v1796, %v1793
    %v1803 = vmul.f32 %v1796, %v1794
    %v1804 = vmul.f32 %v1796, %v1795
    %v1805 = vadd.f32 %v1780, %v1797
    %v1806 = vadd.f32 %v1781, %v1798
    %v1807 = vadd.f32 %v1782, %v1799
    %v1808 = vadd.f32 %v1783, %v1800
    %v1809 = vadd.f32 %v1784, %v1801
    %v1810 = vadd.f32 %v1785, %v1802
    %v1811 = vadd.f32 %v1786, %v1803
    %v1812 = vadd.f32 %v1787, %v1804
    %v1813 = vtanh.pop %v1712
    %v1814 = vtanh.pop %v1717
    %v1815 = vtanh.pop %v1722
    %v1816 = vtanh.pop %v1727
    %v1817 = vtanh.pop %v1732
    %v1818 = vtanh.pop %v1737
    %v1819 = vtanh.pop %v1742
    %v1820 = vtanh.pop %v1747
    %v1821 = vstv %s1760
    %v1822 = vmul.f32 %v1821, %v1813
    %v1823 = vmul.f32 %v1821, %v1814
    %v1824 = vmul.f32 %v1821, %v1815
    %v1825 = vmul.f32 %v1821, %v1816
    %v1826 = vmul.f32 %v1821, %v1817
    %v1827 = vmul.f32 %v1821, %v1818
    %v1828 = vmul.f32 %v1821, %v1819
    %v1829 = vmul.f32 %v1821, %v1820
    %v1830 = vadd.f32 %v1805, %v1822
    %v1831 = vadd.f32 %v1806, %v1823
    %v1832 = vadd.f32 %v1807, %v1824
    %v1833 = vadd.f32 %v1808, %v1825
    %v1834 = vadd.f32 %v1809, %v1826
    %v1835 = vadd.f32 %v1810, %v1827
    %v1836 = vadd.f32 %v1811, %v1828
    %v1837 = vadd.f32 %v1812, %v1829
    %s1838 = sld [smem:[#allocation2 + $0x3c]]
    %s1839 = sld [smem:[#allocation2 + $0x3d]]
    %s1840 = sld [smem:[#allocation2 + $0x3e]]
    %s1841 = sld [smem:[#allocation2 + $0x3f]]
    %s1842 = sld [smem:[#allocation2 + $0x40]]
    %s1843 = sld [smem:[#allocation2 + $0x41]]
    %s1844 = sld [smem:[#allocation2 + $0x42]]
    %s1845 = sld [smem:[#allocation2 + $0x43]]
    %s1846 = sadd.f32 %s1838, %s1842
    %s1847 = sadd.f32 %s1839, %s1843
    %s1848 = sadd.f32 %s1840, %s1844
    %s1849 = sadd.f32 %s1841, %s1845
    %s1850 = sld [smem:[#allocation2 + $0x44]]
    %s1851 = sld [smem:[#allocation2 + $0x45]]
    %s1852 = sld [smem:[#allocation2 + $0x46]]
    %s1853 = sld [smem:[#allocation2 + $0x47]]
    %v1854 = vstv %s1849
    %v1855 = vmul.f32 %v1854, %v1712
    %v1856 = vmul.f32 %v1854, %v1717
    %v1857 = vmul.f32 %v1854, %v1722
    %v1858 = vmul.f32 %v1854, %v1727
    %v1859 = vmul.f32 %v1854, %v1732
    %v1860 = vmul.f32 %v1854, %v1737
    %v1861 = vmul.f32 %v1854, %v1742
    %v1862 = vmul.f32 %v1854, %v1747
    %v1863 = vstv %s1846
    %v1864 = vadd.f32 %v1863, %v1855
    %v1865 = vadd.f32 %v1863, %v1856
    %v1866 = vadd.f32 %v1863, %v1857
    %v1867 = vadd.f32 %v1863, %v1858
    %v1868 = vadd.f32 %v1863, %v1859
    %v1869 = vadd.f32 %v1863, %v1860
    %v1870 = vadd.f32 %v1863, %v1861
    %v1871 = vadd.f32 %v1863, %v1862
    %v1872 = vmul.f32 %v1712, %v1864
    %v1873 = vmul.f32 %v1717, %v1865
    %v1874 = vmul.f32 %v1722, %v1866
    %v1875 = vmul.f32 %v1727, %v1867
    %v1876 = vmul.f32 %v1732, %v1868
    %v1877 = vmul.f32 %v1737, %v1869
    %v1878 = vmul.f32 %v1742, %v1870
    %v1879 = vmul.f32 %v1747, %v1871
    %v1880 = vstv %s1847
    %v1881 = vmul.f32 %v1880, %v1788
    %v1882 = vmul.f32 %v1880, %v1789
    %v1883 = vmul.f32 %v1880, %v1790
    %v1884 = vmul.f32 %v1880, %v1791
    %v1885 = vmul.f32 %v1880, %v1792
    %v1886 = vmul.f32 %v1880, %v1793
    %v1887 = vmul.f32 %v1880, %v1794
    %v1888 = vmul.f32 %v1880, %v1795
    %v1889 = vadd.f32 %v1872, %v1881
    %v1890 = vadd.f32 %v1873, %v1882
    %v1891 = vadd.f32 %v1874, %v1883
    %v1892 = vadd.f32 %v1875, %v1884
    %v1893 = vadd.f32 %v1876, %v1885
    %v1894 = vadd.f32 %v1877, %v1886
    %v1895 = vadd.f32 %v1878, %v1887
    %v1896 = vadd.f32 %v1879, %v1888
    %v1897 = vstv %s1848
    %v1898 = vmul.f32 %v1897, %v1813
    %v1899 = vmul.f32 %v1897, %v1814
    %v1900 = vmul.f32 %v1897, %v1815
    %v1901 = vmul.f32 %v1897, %v1816
    %v1902 = vmul.f32 %v1897, %v1817
    %v1903 = vmul.f32 %v1897, %v1818
    %v1904 = vmul.f32 %v1897, %v1819
    %v1905 = vmul.f32 %v1897, %v1820
    %v1906 = vadd.f32 %v1889, %v1898
    %v1907 = vadd.f32 %v1890, %v1899
    %v1908 = vadd.f32 %v1891, %v1900
    %v1909 = vadd.f32 %v1892, %v1901
    %v1910 = vadd.f32 %v1893, %v1902
    %v1911 = vadd.f32 %v1894, %v1903
    %v1912 = vadd.f32 %v1895, %v1904
    %v1913 = vadd.f32 %v1896, %v1905
    %v1914 = vstv %s1853
    %v1915 = vmul.f32 %v1914, %v1830
    %v1916 = vmul.f32 %v1914, %v1831
    %v1917 = vmul.f32 %v1914, %v1832
    %v1918 = vmul.f32 %v1914, %v1833
    %v1919 = vmul.f32 %v1914, %v1834
    %v1920 = vmul.f32 %v1914, %v1835
    %v1921 = vmul.f32 %v1914, %v1836
    %v1922 = vmul.f32 %v1914, %v1837
    %v1923 = vstv %s1850
    %v1924 = vadd.f32 %v1923, %v1915
    %v1925 = vadd.f32 %v1923, %v1916
    %v1926 = vadd.f32 %v1923, %v1917
    %v1927 = vadd.f32 %v1923, %v1918
    %v1928 = vadd.f32 %v1923, %v1919
    %v1929 = vadd.f32 %v1923, %v1920
    %v1930 = vadd.f32 %v1923, %v1921
    %v1931 = vadd.f32 %v1923, %v1922
    %v1932 = vmul.f32 %v1830, %v1924
    %v1933 = vmul.f32 %v1831, %v1925
    %v1934 = vmul.f32 %v1832, %v1926
    %v1935 = vmul.f32 %v1833, %v1927
    %v1936 = vmul.f32 %v1834, %v1928
    %v1937 = vmul.f32 %v1835, %v1929
    %v1938 = vmul.f32 %v1836, %v1930
    %v1939 = vmul.f32 %v1837, %v1931
    %v1940 = vmax.f32 %v1830, 0.0
    %v1941 = vmax.f32 %v1831, 0.0
    %v1942 = vmax.f32 %v1832, 0.0
    %v1943 = vmax.f32 %v1833, 0.0
    %v1944 = vmax.f32 %v1834, 0.0
    %v1945 = vmax.f32 %v1835, 0.0
    %v1946 = vmax.f32 %v1836, 0.0
    %v1947 = vmax.f32 %v1837, 0.0
    %v1948 = vstv %s1851
    %v1949 = vmul.f32 %v1948, %v1940
    %v1950 = vmul.f32 %v1948, %v1941
    %v1951 = vmul.f32 %v1948, %v1942
    %v1952 = vmul.f32 %v1948, %v1943
    %v1953 = vmul.f32 %v1948, %v1944
    %v1954 = vmul.f32 %v1948, %v1945
    %v1955 = vmul.f32 %v1948, %v1946
    %v1956 = vmul.f32 %v1948, %v1947
    %v1957 = vadd.f32 %v1932, %v1949
    %v1958 = vadd.f32 %v1933, %v1950
    %v1959 = vadd.f32 %v1934, %v1951
    %v1960 = vadd.f32 %v1935, %v1952
    %v1961 = vadd.f32 %v1936, %v1953
    %v1962 = vadd.f32 %v1937, %v1954
    %v1963 = vadd.f32 %v1938, %v1955
    %v1964 = vadd.f32 %v1939, %v1956
    %v1965 = vtanh.pop %v1830
    %v1966 = vtanh.pop %v1831
    %v1967 = vtanh.pop %v1832
    %v1968 = vtanh.pop %v1833
    %v1969 = vtanh.pop %v1834
    %v1970 = vtanh.pop %v1835
    %v1971 = vtanh.pop %v1836
    %v1972 = vtanh.pop %v1837
    %v1973 = vstv %s1852
    %v1974 = vmul.f32 %v1973, %v1965
    %v1975 = vmul.f32 %v1973, %v1966
    %v1976 = vmul.f32 %v1973, %v1967
    %v1977 = vmul.f32 %v1973, %v1968
    %v1978 = vmul.f32 %v1973, %v1969
    %v1979 = vmul.f32 %v1973, %v1970
    %v1980 = vmul.f32 %v1973, %v1971
    %v1981 = vmul.f32 %v1973, %v1972
    %v1982 = vadd.f32 %v1957, %v1974
    %v1983 = vadd.f32 %v1958, %v1975
    %v1984 = vadd.f32 %v1959, %v1976
    %v1985 = vadd.f32 %v1960, %v1977
    %v1986 = vadd.f32 %v1961, %v1978
    %v1987 = vadd.f32 %v1962, %v1979
    %v1988 = vadd.f32 %v1963, %v1980
    %v1989 = vadd.f32 %v1964, %v1981
    %v1990 = vadd.f32 %v1906, %v1982
    %v1991 = vadd.f32 %v1907, %v1983
    %v1992 = vadd.f32 %v1908, %v1984
    %v1993 = vadd.f32 %v1909, %v1985
    %v1994 = vadd.f32 %v1910, %v1986
    %v1995 = vadd.f32 %v1911, %v1987
    %v1996 = vadd.f32 %v1912, %v1988
    %v1997 = vadd.f32 %v1913, %v1989
    %v1998 = vld [vmem:[%s10] sm:$0xf]
    %v1999 = vld [vmem:[%s10 + $0x4] sm:$0xf]
    %v2000 = vld [vmem:[%s10 + $0x8] sm:$0xf]
    %v2001 = vld [vmem:[%s10 + $0xc] sm:$0xf]
    %v2002 = vunpack.c.l.bf16 %v1998
    %v2003 = vunpack.c.l.bf16 %v1999
    %v2004 = vunpack.c.l.bf16 %v2000
    %v2005 = vunpack.c.l.bf16 %v2001
    %v2007 = vsel %vm90, %v1830, 0
    %v2010 = vsel %vm90, %v1831, 0
    %v2013 = vsel %vm90, %v1832, 0
    %v2016 = vsel %vm90, %v1833, 0
    %v2019 = vsel %vm90, %v1834, 0
    %v2022 = vsel %vm90, %v1835, 0
    %v2025 = vsel %vm90, %v1836, 0
    %v2028 = vsel %vm90, %v1837, 0
    %2030 = vmatprep.subr.mxu0 0.0
    %2031 = vmatpush1.msra.mxu0 0.0
    %2032 = vmatprep.subr.mxu0 0.0
    %2033 = vmatpush1.msra.mxu0 0.0
    %2034 = vmatprep.subr.mxu0 0.0
    %2035 = vmatpush1.msra.mxu0 0.0
    %2036 = vmatprep.subr.mxu0 0.0
    %2037 = vmatpush1.msra.mxu0 0.0
    %2038 = vmatprep.subr.mxu0 0.0
    %2039 = vmatpush1.msra.mxu0 0.0
    %2040 = vmatprep.subr.mxu0 0.0
    %2041 = vmatpush1.msra.mxu0 0.0
    %2042 = vmatprep.subr.mxu0 0.0
    %2043 = vmatpush1.msra.mxu0 0.0
    %2044 = vmatprep.subr.mxu0 0.0
    %2045 = vmatpush1.msra.mxu0 0.0
    %2046 = vmatprep.subr.mxu0 0.0
    %2047 = vmatpush1.msra.mxu0 0.0
    %2048 = vmatprep.subr.mxu0 0.0
    %2049 = vmatpush1.msra.mxu0 0.0
    %2050 = vmatprep.subr.mxu0 0.0
    %2051 = vmatpush1.msra.mxu0 0.0
    %2052 = vmatprep.subr.mxu0 0.0
    %2053 = vmatpush1.msra.mxu0 0.0
    %2054 = vmatprep.subr.mxu0 0.0
    %2055 = vmatpush1.msra.mxu0 %v2005
    %2056 = vmatprep.subr.mxu0 0.0
    %2057 = vmatpush1.msra.mxu0 %v2004
    %2058 = vmatprep.subr.mxu0 0.0
    %2059 = vmatpush1.msra.mxu0 %v2003
    %2060 = vmatprep.subr.mxu0 0.0
    %2061 = vmatpush1.msra.mxu0 %v2002
    %2062 = vmatprep.subr.mxu0 0.0
    %2063 = vmatpush2.msra.mxu0 0.0
    %2064 = vmatprep.subr.mxu0 0.0
    %2065 = vmatpush2.msra.mxu0 0.0
    %2066 = vmatprep.subr.mxu0 0.0
    %2067 = vmatpush2.msra.mxu0 0.0
    %2068 = vmatprep.subr.mxu0 0.0
    %2069 = vmatpush2.msra.mxu0 0.0
    %2070 = vmatprep.subr.mxu0 0.0
    %2071 = vmatpush2.msra.mxu0 0.0
    %2072 = vmatprep.subr.mxu0 0.0
    %2073 = vmatpush2.msra.mxu0 0.0
    %2074 = vmatprep.subr.mxu0 0.0
    %2075 = vmatpush2.msra.mxu0 0.0
    %2076 = vmatprep.subr.mxu0 0.0
    %2077 = vmatpush2.msra.mxu0 0.0
    %2078 = vmatprep.subr.mxu0 0.0
    %2079 = vmatpush2.msra.mxu0 0.0
    %2080 = vmatprep.subr.mxu0 0.0
    %2081 = vmatpush2.msra.mxu0 0.0
    %2082 = vmatprep.subr.mxu0 0.0
    %2083 = vmatpush2.msra.mxu0 0.0
    %2084 = vmatprep.subr.mxu0 0.0
    %2085 = vmatpush2.msra.mxu0 0.0
    %2086 = vmatprep.subr.mxu0 0.0
    %2087 = vmatpush2.msra.mxu0 0.0
    %2088 = vmatprep.subr.mxu0 0.0
    %2089 = vmatpush2.msra.mxu0 0.0
    %2090 = vmatprep.subr.mxu0 0.0
    %2091 = vmatpush2.msra.mxu0 0.0
    %2092 = vmatprep.subr.mxu0 0.0
    %2093 = vmatpush2.msra.mxu0 0.0
    %2094 = vmatprep.mubr.f32.mxu0 0.0
    %2095 = vmatmul.mubr.f32.gmra.mxu0 %v2007
    %v2096 = vpop.f32.mrf.mxu0
    %v2097 = vadd.f32 0.0, %v2096
    %v2098 = vpop.f32.mrf.mxu0
    %2099 = vmatprep.mubr.f32.mxu0 0.0
    %2100 = vmatmul.mubr.f32.gmra.mxu0 %v2010
    %v2101 = vpop.f32.mrf.mxu0
    %v2102 = vadd.f32 0.0, %v2101
    %v2103 = vpop.f32.mrf.mxu0
    %2104 = vmatprep.mubr.f32.mxu0 0.0
    %2105 = vmatmul.mubr.f32.gmra.mxu0 %v2013
    %v2106 = vpop.f32.mrf.mxu0
    %v2107 = vadd.f32 0.0, %v2106
    %v2108 = vpop.f32.mrf.mxu0
    %2109 = vmatprep.mubr.f32.mxu0 0.0
    %2110 = vmatmul.mubr.f32.gmra.mxu0 %v2016
    %v2111 = vpop.f32.mrf.mxu0
    %v2112 = vadd.f32 0.0, %v2111
    %v2113 = vpop.f32.mrf.mxu0
    %2114 = vmatprep.mubr.f32.mxu0 0.0
    %2115 = vmatmul.mubr.f32.gmra.mxu0 %v2019
    %v2116 = vpop.f32.mrf.mxu0
    %v2117 = vadd.f32 0.0, %v2116
    %v2118 = vpop.f32.mrf.mxu0
    %2119 = vmatprep.mubr.f32.mxu0 0.0
    %2120 = vmatmul.mubr.f32.gmra.mxu0 %v2022
    %v2121 = vpop.f32.mrf.mxu0
    %v2122 = vadd.f32 0.0, %v2121
    %v2123 = vpop.f32.mrf.mxu0
    %2124 = vmatprep.mubr.f32.mxu0 0.0
    %2125 = vmatmul.mubr.f32.gmra.mxu0 %v2025
    %v2126 = vpop.f32.mrf.mxu0
    %v2127 = vadd.f32 0.0, %v2126
    %v2128 = vpop.f32.mrf.mxu0
    %2129 = vmatprep.mubr.f32.mxu0 0.0
    %2130 = vmatmul.mubr.f32.gmra.mxu0 %v2028
    %v2131 = vpop.f32.mrf.mxu0
    %v2132 = vadd.f32 0.0, %v2131
    %v2133 = vpop.f32.mrf.mxu0
    %2134 = vdwg.mxu0
    %v2136 = vsel %vm90, %v1990, 0
    %v2139 = vsel %vm90, %v1991, 0
    %v2142 = vsel %vm90, %v1992, 0
    %v2145 = vsel %vm90, %v1993, 0
    %v2148 = vsel %vm90, %v1994, 0
    %v2151 = vsel %vm90, %v1995, 0
    %v2154 = vsel %vm90, %v1996, 0
    %v2157 = vsel %vm90, %v1997, 0
    %2159 = vmatprep.subr.mxu0 0.0
    %2160 = vmatpush1.msra.mxu0 0.0
    %2161 = vmatprep.subr.mxu0 0.0
    %2162 = vmatpush1.msra.mxu0 0.0
    %2163 = vmatprep.subr.mxu0 0.0
    %2164 = vmatpush1.msra.mxu0 0.0
    %2165 = vmatprep.subr.mxu0 0.0
    %2166 = vmatpush1.msra.mxu0 0.0
    %2167 = vmatprep.subr.mxu0 0.0
    %2168 = vmatpush1.msra.mxu0 0.0
    %2169 = vmatprep.subr.mxu0 0.0
    %2170 = vmatpush1.msra.mxu0 0.0
    %2171 = vmatprep.subr.mxu0 0.0
    %2172 = vmatpush1.msra.mxu0 0.0
    %2173 = vmatprep.subr.mxu0 0.0
    %2174 = vmatpush1.msra.mxu0 0.0
    %2175 = vmatprep.subr.mxu0 0.0
    %2176 = vmatpush1.msra.mxu0 0.0
    %2177 = vmatprep.subr.mxu0 0.0
    %2178 = vmatpush1.msra.mxu0 0.0
    %2179 = vmatprep.subr.mxu0 0.0
    %2180 = vmatpush1.msra.mxu0 0.0
    %2181 = vmatprep.subr.mxu0 0.0
    %2182 = vmatpush1.msra.mxu0 0.0
    %2183 = vmatprep.subr.mxu0 0.0
    %2184 = vmatpush1.msra.mxu0 %v2005
    %2185 = vmatprep.subr.mxu0 0.0
    %2186 = vmatpush1.msra.mxu0 %v2004
    %2187 = vmatprep.subr.mxu0 0.0
    %2188 = vmatpush1.msra.mxu0 %v2003
    %2189 = vmatprep.subr.mxu0 0.0
    %2190 = vmatpush1.msra.mxu0 %v2002
    %2191 = vmatprep.subr.mxu0 0.0
    %2192 = vmatpush2.msra.mxu0 0.0
    %2193 = vmatprep.subr.mxu0 0.0
    %2194 = vmatpush2.msra.mxu0 0.0
    %2195 = vmatprep.subr.mxu0 0.0
    %2196 = vmatpush2.msra.mxu0 0.0
    %2197 = vmatprep.subr.mxu0 0.0
    %2198 = vmatpush2.msra.mxu0 0.0
    %2199 = vmatprep.subr.mxu0 0.0
    %2200 = vmatpush2.msra.mxu0 0.0
    %2201 = vmatprep.subr.mxu0 0.0
    %2202 = vmatpush2.msra.mxu0 0.0
    %2203 = vmatprep.subr.mxu0 0.0
    %2204 = vmatpush2.msra.mxu0 0.0
    %2205 = vmatprep.subr.mxu0 0.0
    %2206 = vmatpush2.msra.mxu0 0.0
    %2207 = vmatprep.subr.mxu0 0.0
    %2208 = vmatpush2.msra.mxu0 0.0
    %2209 = vmatprep.subr.mxu0 0.0
    %2210 = vmatpush2.msra.mxu0 0.0
    %2211 = vmatprep.subr.mxu0 0.0
    %2212 = vmatpush2.msra.mxu0 0.0
    %2213 = vmatprep.subr.mxu0 0.0
    %2214 = vmatpush2.msra.mxu0 0.0
    %2215 = vmatprep.subr.mxu0 0.0
    %2216 = vmatpush2.msra.mxu0 0.0
    %2217 = vmatprep.subr.mxu0 0.0
    %2218 = vmatpush2.msra.mxu0 0.0
    %2219 = vmatprep.subr.mxu0 0.0
    %2220 = vmatpush2.msra.mxu0 0.0
    %2221 = vmatprep.subr.mxu0 0.0
    %2222 = vmatpush2.msra.mxu0 0.0
    %2223 = vmatprep.mubr.f32.mxu0 0.0
    %2224 = vmatmul.mubr.f32.gmra.mxu0 %v2136
    %v2225 = vpop.f32.mrf.mxu0
    %v2226 = vadd.f32 0.0, %v2225
    %v2227 = vpop.f32.mrf.mxu0
    %2228 = vmatprep.mubr.f32.mxu0 0.0
    %2229 = vmatmul.mubr.f32.gmra.mxu0 %v2139
    %v2230 = vpop.f32.mrf.mxu0
    %v2231 = vadd.f32 0.0, %v2230
    %v2232 = vpop.f32.mrf.mxu0
    %2233 = vmatprep.mubr.f32.mxu0 0.0
    %2234 = vmatmul.mubr.f32.gmra.mxu0 %v2142
    %v2235 = vpop.f32.mrf.mxu0
    %v2236 = vadd.f32 0.0, %v2235
    %v2237 = vpop.f32.mrf.mxu0
    %2238 = vmatprep.mubr.f32.mxu0 0.0
    %2239 = vmatmul.mubr.f32.gmra.mxu0 %v2145
    %v2240 = vpop.f32.mrf.mxu0
    %v2241 = vadd.f32 0.0, %v2240
    %v2242 = vpop.f32.mrf.mxu0
    %2243 = vmatprep.mubr.f32.mxu0 0.0
    %2244 = vmatmul.mubr.f32.gmra.mxu0 %v2148
    %v2245 = vpop.f32.mrf.mxu0
    %v2246 = vadd.f32 0.0, %v2245
    %v2247 = vpop.f32.mrf.mxu0
    %2248 = vmatprep.mubr.f32.mxu0 0.0
    %2249 = vmatmul.mubr.f32.gmra.mxu0 %v2151
    %v2250 = vpop.f32.mrf.mxu0
    %v2251 = vadd.f32 0.0, %v2250
    %v2252 = vpop.f32.mrf.mxu0
    %2253 = vmatprep.mubr.f32.mxu0 0.0
    %2254 = vmatmul.mubr.f32.gmra.mxu0 %v2154
    %v2255 = vpop.f32.mrf.mxu0
    %v2256 = vadd.f32 0.0, %v2255
    %v2257 = vpop.f32.mrf.mxu0
    %2258 = vmatprep.mubr.f32.mxu0 0.0
    %2259 = vmatmul.mubr.f32.gmra.mxu0 %v2157
    %v2260 = vpop.f32.mrf.mxu0
    %v2261 = vadd.f32 0.0, %v2260
    %v2262 = vpop.f32.mrf.mxu0
    %2263 = vdwg.mxu0
    %v2264 = vld [vmem:[%s11] sm:$0xff]
    %v2265 = vld [vmem:[%s11 + $0x8] sm:$0x3]
    %v2266 = vld [vmem:[%s12] sm:$0xff]
    %v2267 = vld [vmem:[%s12 + $0x8] sm:$0x3]
    %vm2268 = vcmask 523264
    %v2270 = vsel %vm2268, %v2266, 0
    %v2273 = vsel %vm2268, %v2267, 0
    %2275 = vmatprep.subr.mxu0 0.0
    %2276 = vmatpush1.msra.mxu0 0.0
    %2277 = vmatprep.subr.mxu0 0.0
    %2278 = vmatpush1.msra.mxu0 0.0
    %2279 = vmatprep.subr.mxu0 0.0
    %2280 = vmatpush1.msra.mxu0 0.0
    %2281 = vmatprep.subr.mxu0 0.0
    %2282 = vmatpush1.msra.mxu0 0.0
    %2283 = vmatprep.subr.mxu0 0.0
    %2284 = vmatpush1.msra.mxu0 0.0
    %2285 = vmatprep.subr.mxu0 0.0
    %2286 = vmatpush1.msra.mxu0 0.0
    %2287 = vmatprep.subr.mxu0 0.0
    %2288 = vmatpush1.msra.mxu0 0.0
    %2289 = vmatprep.subr.mxu0 0.0
    %2290 = vmatpush1.msra.mxu0 0.0
    %2291 = vmatprep.subr.mxu0 0.0
    %2292 = vmatpush1.msra.mxu0 %v2261
    %2293 = vmatprep.subr.mxu0 0.0
    %2294 = vmatpush1.msra.mxu0 %v2256
    %2295 = vmatprep.subr.mxu0 0.0
    %2296 = vmatpush1.msra.mxu0 %v2251
    %2297 = vmatprep.subr.mxu0 0.0
    %2298 = vmatpush1.msra.mxu0 %v2246
    %2299 = vmatprep.subr.mxu0 0.0
    %2300 = vmatpush1.msra.mxu0 %v2241
    %2301 = vmatprep.subr.mxu0 0.0
    %2302 = vmatpush1.msra.mxu0 %v2236
    %2303 = vmatprep.subr.mxu0 0.0
    %2304 = vmatpush1.msra.mxu0 %v2231
    %2305 = vmatprep.subr.mxu0 0.0
    %2306 = vmatpush1.msra.mxu0 %v2226
    %2307 = vmatprep.subr.mxu0 0.0
    %2308 = vmatpush2.msra.mxu0 0.0
    %2309 = vmatprep.subr.mxu0 0.0
    %2310 = vmatpush2.msra.mxu0 0.0
    %2311 = vmatprep.subr.mxu0 0.0
    %2312 = vmatpush2.msra.mxu0 0.0
    %2313 = vmatprep.subr.mxu0 0.0
    %2314 = vmatpush2.msra.mxu0 0.0
    %2315 = vmatprep.subr.mxu0 0.0
    %2316 = vmatpush2.msra.mxu0 0.0
    %2317 = vmatprep.subr.mxu0 0.0
    %2318 = vmatpush2.msra.mxu0 0.0
    %2319 = vmatprep.subr.mxu0 0.0
    %2320 = vmatpush2.msra.mxu0 0.0
    %2321 = vmatprep.subr.mxu0 0.0
    %2322 = vmatpush2.msra.mxu0 0.0
    %2323 = vmatprep.subr.mxu0 0.0
    %2324 = vmatpush2.msra.mxu0 0.0
    %2325 = vmatprep.subr.mxu0 0.0
    %2326 = vmatpush2.msra.mxu0 0.0
    %2327 = vmatprep.subr.mxu0 0.0
    %2328 = vmatpush2.msra.mxu0 0.0
    %2329 = vmatprep.subr.mxu0 0.0
    %2330 = vmatpush2.msra.mxu0 0.0
    %2331 = vmatprep.subr.mxu0 0.0
    %2332 = vmatpush2.msra.mxu0 0.0
    %2333 = vmatprep.subr.mxu0 0.0
    %2334 = vmatpush2.msra.mxu0 0.0
    %2335 = vmatprep.subr.mxu0 0.0
    %2336 = vmatpush2.msra.mxu0 0.0
    %2337 = vmatprep.subr.mxu0 0.0
    %2338 = vmatpush2.msra.mxu0 0.0
    %2339 = vmatprep.mubr.f32.mxu0 0.0
    %2340 = vmatmul.mubr.f32.gmra.mxu0 %v2270
    %v2341 = vpop.f32.mrf.mxu0
    %v2342 = vadd.f32 0.0, %v2341
    %v2343 = vpop.f32.mrf.mxu0
    %2344 = vmatprep.mubr.f32.mxu0 0.0
    %2345 = vmatmul.mubr.f32.gmra.mxu0 %v2273
    %v2346 = vpop.f32.mrf.mxu0
    %v2347 = vadd.f32 0.0, %v2346
    %v2348 = vpop.f32.mrf.mxu0
    %2349 = vdwg.mxu0
    %v2351 = vsel %vm2268, %v2264, 0
    %v2354 = vsel %vm2268, %v2265, 0
    %2356 = vmatprep.subr.mxu0 0.0
    %2357 = vmatpush1.msra.mxu0 0.0
    %2358 = vmatprep.subr.mxu0 0.0
    %2359 = vmatpush1.msra.mxu0 0.0
    %2360 = vmatprep.subr.mxu0 0.0
    %2361 = vmatpush1.msra.mxu0 0.0
    %2362 = vmatprep.subr.mxu0 0.0
    %2363 = vmatpush1.msra.mxu0 0.0
    %2364 = vmatprep.subr.mxu0 0.0
    %2365 = vmatpush1.msra.mxu0 0.0
    %2366 = vmatprep.subr.mxu0 0.0
    %2367 = vmatpush1.msra.mxu0 0.0
    %2368 = vmatprep.subr.mxu0 0.0
    %2369 = vmatpush1.msra.mxu0 0.0
    %2370 = vmatprep.subr.mxu0 0.0
    %2371 = vmatpush1.msra.mxu0 0.0
    %2372 = vmatprep.subr.mxu0 0.0
    %2373 = vmatpush1.msra.mxu0 %v2132
    %2374 = vmatprep.subr.mxu0 0.0
    %2375 = vmatpush1.msra.mxu0 %v2127
    %2376 = vmatprep.subr.mxu0 0.0
    %2377 = vmatpush1.msra.mxu0 %v2122
    %2378 = vmatprep.subr.mxu0 0.0
    %2379 = vmatpush1.msra.mxu0 %v2117
    %2380 = vmatprep.subr.mxu0 0.0
    %2381 = vmatpush1.msra.mxu0 %v2112
    %2382 = vmatprep.subr.mxu0 0.0
    %2383 = vmatpush1.msra.mxu0 %v2107
    %2384 = vmatprep.subr.mxu0 0.0
    %2385 = vmatpush1.msra.mxu0 %v2102
    %2386 = vmatprep.subr.mxu0 0.0
    %2387 = vmatpush1.msra.mxu0 %v2097
    %2388 = vmatprep.subr.mxu0 0.0
    %2389 = vmatpush2.msra.mxu0 0.0
    %2390 = vmatprep.subr.mxu0 0.0
    %2391 = vmatpush2.msra.mxu0 0.0
    %2392 = vmatprep.subr.mxu0 0.0
    %2393 = vmatpush2.msra.mxu0 0.0
    %2394 = vmatprep.subr.mxu0 0.0
    %2395 = vmatpush2.msra.mxu0 0.0
    %2396 = vmatprep.subr.mxu0 0.0
    %2397 = vmatpush2.msra.mxu0 0.0
    %2398 = vmatprep.subr.mxu0 0.0
    %2399 = vmatpush2.msra.mxu0 0.0
    %2400 = vmatprep.subr.mxu0 0.0
    %2401 = vmatpush2.msra.mxu0 0.0
    %2402 = vmatprep.subr.mxu0 0.0
    %2403 = vmatpush2.msra.mxu0 0.0
    %2404 = vmatprep.subr.mxu0 0.0
    %2405 = vmatpush2.msra.mxu0 0.0
    %2406 = vmatprep.subr.mxu0 0.0
    %2407 = vmatpush2.msra.mxu0 0.0
    %2408 = vmatprep.subr.mxu0 0.0
    %2409 = vmatpush2.msra.mxu0 0.0
    %2410 = vmatprep.subr.mxu0 0.0
    %2411 = vmatpush2.msra.mxu0 0.0
    %2412 = vmatprep.subr.mxu0 0.0
    %2413 = vmatpush2.msra.mxu0 0.0
    %2414 = vmatprep.subr.mxu0 0.0
    %2415 = vmatpush2.msra.mxu0 0.0
    %2416 = vmatprep.subr.mxu0 0.0
    %2417 = vmatpush2.msra.mxu0 0.0
    %2418 = vmatprep.subr.mxu0 0.0
    %2419 = vmatpush2.msra.mxu0 0.0
    %2420 = vmatprep.mubr.f32.mxu0 0.0
    %2421 = vmatmul.mubr.f32.gmra.mxu0 %v2351
    %v2422 = vpop.f32.mrf.mxu0
    %v2423 = vadd.f32 %v2342, %v2422
    %v2424 = vpop.f32.mrf.mxu0
    %2425 = vmatprep.mubr.f32.mxu0 0.0
    %2426 = vmatmul.mubr.f32.gmra.mxu0 %v2354
    %v2427 = vpop.f32.mrf.mxu0
    %v2428 = vadd.f32 %v2347, %v2427
    %v2429 = vpop.f32.mrf.mxu0
    %2430 = vdwg.mxu0
    %v2431 = vld [vmem:[%s13] sm:$0xff]
    %v2432 = vld [vmem:[%s13 + $0x8] sm:$0x3]
    %2434 = vset.pattern.permute.xlu0 0
    %2435 = vperm.xlu0 %2434, %v2431
    %v2436 = vpop.permute.xlu0 %2435
    %2439 = vset.pattern.permute.xlu0 0
    %2440 = vperm.xlu0 %2439, %v2432
    %v2441 = vpop.permute.xlu0 %2440
    %v2443 = vadd.f32 %v2423, %v2436
    %v2444 = vadd.f32 %v2428, %v2441
    %vm2445 = vcmask 15360
    %2446 = vst.msk [vmem:[%s14] sm:$0xff] %vm2445, %v2443
    %vm2447 = vcmask 9216
    %2448 = vst.msk [vmem:[%s14 + $0x8] sm:$0x3] %vm2447, %v2444
    // Predicated region
    $region62: #{forward.1} parent=1 // pred_check
      _
    $region63: #{forward.1} parent=1 // pred_check_branch
      %2450 = sbr.rel (0) target = $region65
    $region64: #{forward.1} parent=1 // pred_region
      _
    $region65: #{forward.1} parent=1 // pred_fallthru
      _
    // Predicated region
    $region66: #{forward.1} parent=1 // pred_check
      _
    $region67: #{forward.1} parent=1 // pred_check_branch
      %2452 = sbr.rel (0) target = $region69
    $region68: #{forward.1} parent=1 // pred_region
      _
    $region69: #{forward.1} parent=1 // pred_fallthru
      _
    %2453 = vsyncpa [#allocation3], 1

</llo_original>
